<compile_context>
chip_gen: v7x
topology: tpu7x:2x2x1
jax: 0.10.0
libtpu: 0.0.40
codegen_flags: <defaults>
</compile_context>

<pallas_src>
import functools
import math

import jax
import jax.numpy as jnp
from jax import lax
from jax.experimental import pallas as pl
from jax.experimental.pallas import tpu as pltpu


def _round_up(x, m):
    return ((x + m - 1) // m) * m


# ----------------------------------------------------------------------------
# Kernel: one batch-block per grid step.  Everything inside is 2-D except the
# (leading-dim-split) reshapes used for the per-batch softmax/context reduces.
# ----------------------------------------------------------------------------
def _mha_ffn_kernel(q_ref, k_ref, v_ref, mask_ref,
                    wq_ref, wk_ref, wv_ref, wfc_ref, w1_ref, w2_ref, vec_ref,
                    out_ref, attn_ref,
                    *, n_head, d_k, d_v, d_model, d_hid, len_k):
    f32 = jnp.float32
    bf16 = jnp.bfloat16
    Bb = q_ref.shape[0]
    Hdk = n_head * d_k
    Hdv = n_head * d_v

    # ---- Q/K/V projections on the MXU (bf16 operands, f32 accumulation) ----
    scale = f32(1.0 / math.sqrt(d_k))
    qp = jnp.dot(q_ref[...], wq_ref[...], preferred_element_type=f32) * scale  # [Bb, Hdk]
    kp = jnp.dot(k_ref[...], wk_ref[...], preferred_element_type=f32)          # [Bb*Lk, Hdk]
    vp = jnp.dot(v_ref[...], wv_ref[...], preferred_element_type=f32)          # [Bb*Lk, Hdv]

    # ---- fused multi-head attention (no per-head Python loop) ----
    # group-sum matrix  G[c, h] = 1  iff lane c belongs to head h   (score reduce)
    r = lax.broadcasted_iota(jnp.int32, (Hdk, n_head), 0)
    c = lax.broadcasted_iota(jnp.int32, (Hdk, n_head), 1)
    G = ((r >= c * d_k) & (r < (c + 1) * d_k)).astype(f32)
    # group-expand matrix E[h, c] = 1  iff lane c belongs to head h (prob expand)
    h_i = lax.broadcasted_iota(jnp.int32, (n_head, Hdv), 0)
    c_i = lax.broadcasted_iota(jnp.int32, (n_head, Hdv), 1)
    E = ((c_i >= h_i * d_v) & (c_i < (h_i + 1) * d_v)).astype(f32)

    # scores: s[b*Lk+l, h] = sum_d qp[b, h*dk+d] * kp[b*Lk+l, h*dk+d]
    q_rep = jnp.broadcast_to(qp[:, None, :], (Bb, len_k, Hdk)).reshape(Bb * len_k, Hdk)
    s = jnp.dot(q_rep * kp, G, preferred_element_type=f32)              # [Bb*Lk, H]

    keep = mask_ref[...] > f32(0.0)                                     # [Bb*Lk, 1]
    s = jnp.where(keep, s, f32(-1e9))                                   # masked_fill

    # softmax over Lk (per batch row, per head) -- exact reciprocal: attn is
    # a kernel output consumed downstream.
    s3 = s.reshape(Bb, len_k, n_head)
    m = jnp.max(s3, axis=1, keepdims=True)
    e = jnp.exp(s3 - m)
    denom = jnp.sum(e, axis=1, keepdims=True)
    a3 = e / denom                                                      # [Bb, Lk, H]
    a2 = a3.reshape(Bb * len_k, n_head)

    # single dense store of the attention weights (permuted to [B,H,1,Lk] in XLA)
    attn_ref[...] = a2.astype(attn_ref.dtype)

    # context: ctx[b, h*dv+j] = sum_l a[b,l,h] * vp[b,l,h*dv+j]
    wctx = jnp.dot(a2, E, preferred_element_type=f32) * vp              # [Bb*Lk, Hdv]
    ctx = jnp.sum(wctx.reshape(Bb, len_k, Hdv), axis=1)                 # [Bb, Hdv]

    # ---- biases + LayerNorm params (tiny f32 block, kept f32 for VPU math) ----
    vec = vec_ref[...]
    b1 = vec[0:1, :d_hid]
    b2 = vec[1:2, :d_model]
    g1 = vec[2:3, :d_model]
    be1 = vec[3:4, :d_model]
    g2 = vec[4:5, :d_model]
    be2 = vec[5:6, :d_model]

    # ---- output projection + residual + LayerNorm (eps = 1e-6) ----
    resid = q_ref[...].astype(f32)
    x = jnp.dot(ctx.astype(bf16), wfc_ref[...], preferred_element_type=f32) + resid
    mu = jnp.mean(x, axis=-1, keepdims=True)
    xc = x - mu
    var = jnp.mean(xc * xc, axis=-1, keepdims=True)
    x = xc * lax.rsqrt(var + f32(1e-6)) * g1 + be1

    # ---- position-wise FFN + residual + LayerNorm ----
    hmid = jnp.maximum(
        jnp.dot(x.astype(bf16), w1_ref[...], preferred_element_type=f32) + b1, f32(0.0))
    y = jnp.dot(hmid.astype(bf16), w2_ref[...], preferred_element_type=f32) + b2 + x
    mu = jnp.mean(y, axis=-1, keepdims=True)
    yc = y - mu
    var = jnp.mean(yc * yc, axis=-1, keepdims=True)
    y = yc * lax.rsqrt(var + f32(1e-6)) * g2 + be2

    out_ref[...] = y.astype(out_ref.dtype)


# ----------------------------------------------------------------------------
# block_b from an explicit VMEM budget (double-buffered activations + resident
# single-buffered weights).  Prefers >=2 grid steps so both v7x TCs get work.
# ----------------------------------------------------------------------------
def _pick_block_b(B, Lk, d_model, d_hid, n_head, d_k, d_v, budget_bytes):
    Hdk, Hdv = n_head * d_k, n_head * d_v
    w_elems = 2 * d_model * Hdk + 2 * d_model * Hdv + 2 * d_model * d_hid
    resident = 2 * w_elems + 4 * 8 * max(d_model, d_hid)        # bf16 weights + f32 vec

    def per_step(bb):
        kv = 2 * 2 * bb * Lk * d_model * 2                      # K,V blocks, 2-buffered, bf16
        qb = 2 * bb * d_model * 2                               # q block, bf16
        mb = 2 * bb * Lk * 128 * 4                              # mask [bb*Lk,1], lane-padded
        ob = 2 * bb * d_model * 4                               # out block, f32
        ab = 2 * bb * Lk * 128 * 4                              # attn [bb*Lk,H], lane-padded
        return kv + qb + mb + ob + ab

    # legal batch blocks: divisors of B that are multiples of 8 (sublane rule),
    # plus B itself (block == full dim is always allowed).
    cands = [d for d in range(B, 0, -1) if B % d == 0 and (d % 8 == 0 or d == B)]
    fitting = [d for d in cands if resident + per_step(d) <= budget_bytes]
    if not fitting:
        fitting = [cands[-1]]            # smallest legal block; may exceed budget
    multi = [d for d in fitting if B // d >= 2]
    return multi[0] if multi else fitting[0]


# ----------------------------------------------------------------------------
# Wrapper
# ----------------------------------------------------------------------------
def my_multi_head_attention_forward(q, k, v, mask, params, *, n_head, d_k, d_v,
                                    vmem_budget_bytes=24 * 1024 * 1024):
    """q: [B, d_model]; k, v: [B, L, d_model]; mask: [B, L] (1=keep) or None."""
    assert q.ndim == 2, "this kernel implements the 2-D-query (len_q==1) path"
    B, d_model = q.shape
    Lk = k.shape[1]
    assert v.shape[1] == Lk
    d_hid = params["w1"].shape[1]

    f32, bf16 = jnp.float32, jnp.bfloat16

    # bf16 MXU operands (accumulation stays f32 inside the kernel)
    q_bf = q.astype(bf16)
    k_flat = k.reshape(B * Lk, d_model).astype(bf16)
    v_flat = v.reshape(B * Lk, d_model).astype(bf16)
    if mask is None:
        mask = jnp.ones((B, Lk), f32)
    mask_flat = mask.astype(f32).reshape(B * Lk, 1)

    w_qs = params["w_qs"].astype(bf16)
    w_ks = params["w_ks"].astype(bf16)
    w_vs = params["w_vs"].astype(bf16)
    w_fc = params["w_fc"].astype(bf16)
    w1 = params["w1"].astype(bf16)
    w2 = params["w2"].astype(bf16)

    # biases + LayerNorm params packed into one tiny resident f32 block
    c_vec = max(d_model, d_hid)
    vec = jnp.zeros((8, c_vec), f32)
    for i, name in enumerate(("b1", "b2", "g1", "be1", "g2", "be2")):
        vv = params[name].reshape(-1).astype(f32)
        vec = vec.at[i, :vv.shape[0]].set(vv)

    block_b = _pick_block_b(B, Lk, d_model, d_hid, n_head, d_k, d_v,
                            vmem_budget_bytes)
    grid = (B // block_b,)

    kernel = functools.partial(
        _mha_ffn_kernel, n_head=n_head, d_k=d_k, d_v=d_v,
        d_model=d_model, d_hid=d_hid, len_k=Lk)

    flops = (2 * B * d_model * n_head * d_k
             + 2 * B * Lk * d_model * (n_head * d_k + n_head * d_v)
             + 2 * B * Lk * n_head * d_k + 2 * B * Lk * n_head * d_v
             + 2 * B * n_head * d_v * d_model
             + 4 * B * d_model * d_hid)
    w_bytes = 2 * sum(int(a.size) for a in (w_qs, w_ks, w_vs, w_fc, w1, w2))
    bytes_accessed = (2 * int(q_bf.size + k_flat.size + v_flat.size)
                      + 4 * int(mask_flat.size) + w_bytes + 4 * int(vec.size)
                      + 4 * B * d_model + 4 * B * Lk * n_head)
    cost = pl.CostEstimate(flops=int(flops),
                           transcendentals=int(B * Lk * n_head + 4 * B),
                           bytes_accessed=int(bytes_accessed))

    def run(single_buffer_weights):
        res_kwargs = ({"pipeline_mode": pl.Buffered(1)}
                      if single_buffer_weights else {})

        def resident(shape):
            return pl.BlockSpec(shape, lambda i: (0, 0), **res_kwargs)

        grid_spec = pltpu.PrefetchScalarGridSpec(
            num_scalar_prefetch=0,
            grid=grid,
            in_specs=[
                pl.BlockSpec((block_b, d_model), lambda i: (i, 0)),        # q
                pl.BlockSpec((block_b * Lk, d_model), lambda i: (i, 0)),   # k (flat)
                pl.BlockSpec((block_b * Lk, d_model), lambda i: (i, 0)),   # v (flat)
                pl.BlockSpec((block_b * Lk, 1), lambda i: (i, 0)),         # mask
                resident(w_qs.shape), resident(w_ks.shape), resident(w_vs.shape),
                resident(w_fc.shape), resident(w1.shape), resident(w2.shape),
                resident(vec.shape),
            ],
            out_specs=(
                pl.BlockSpec((block_b, d_model), lambda i: (i, 0)),
                pl.BlockSpec((block_b * Lk, n_head), lambda i: (i, 0)),
            ),
        )
        return pl.pallas_call(
            kernel,
            out_shape=(jax.ShapeDtypeStruct((B, d_model), f32),
                       jax.ShapeDtypeStruct((B * Lk, n_head), f32)),
            grid_spec=grid_spec,
            compiler_params=pltpu.CompilerParams(
                dimension_semantics=("parallel",),
                vmem_limit_bytes=32 * 1024 * 1024),
            cost_estimate=cost,
        )(q_bf, k_flat, v_flat, mask_flat, w_qs, w_ks, w_vs, w_fc, w1, w2, vec)

    try:
        out, attn_raw = run(True)
    except Exception:  # fallback if single-buffered resident blocks are unsupported
        out, attn_raw = run(False)

    # tiny permutation of the aux output done by XLA (outside the kernel)
    attn = attn_raw.reshape(B, Lk, n_head).transpose(0, 2, 1)[:, :, None, :]
    return out, attn


# ----------------------------------------------------------------------------
# Plain-JAX mirror of the PyTorch forward (eval mode) for verification.
# ----------------------------------------------------------------------------
def reference_forward(q, k, v, mask, p, *, n_head, d_k, d_v):
    B, d_model = q.shape
    Lk = k.shape[1]
    q3 = q[:, None, :]
    residual = q3
    Q = (q3 @ p["w_qs"]).reshape(B, 1, n_head, d_k).transpose(0, 2, 1, 3)
    K = (k @ p["w_ks"]).reshape(B, Lk, n_head, d_k).transpose(0, 2, 1, 3)
    V = (v @ p["w_vs"]).reshape(B, Lk, n_head, d_v).transpose(0, 2, 1, 3)
    attn = jnp.einsum("bhqd,bhkd->bhqk", Q / math.sqrt(d_k), K)
    if mask is not None:
        attn = jnp.where(mask[:, None, None, :] == 0, -1e9, attn)
    attn = jax.nn.softmax(attn, axis=-1)
    o = jnp.einsum("bhqk,bhkd->bhqd", attn, V)
    o = o.transpose(0, 2, 1, 3).reshape(B, 1, n_head * d_v)
    o = o @ p["w_fc"] + residual

    def ln(x, g, b):
        mu = jnp.mean(x, axis=-1, keepdims=True)
        var = jnp.mean((x - mu) ** 2, axis=-1, keepdims=True)
        return (x - mu) / jnp.sqrt(var + 1e-6) * g + b

    o = ln(o, p["g1"], p["be1"])
    h = jax.nn.relu(o @ p["w1"] + p["b1"])
    y = h @ p["w2"] + p["b2"] + o
    y = ln(y, p["g2"], p["be2"])
    return y[:, 0, :], attn


if __name__ == "__main__":
    B, L = 2, 8
    d_model, n_head, d_k, d_v = 32, 4, 8, 8
    d_hid = d_model  # PositionwiseFeedForward(d_model, d_model)

    key = jax.random.PRNGKey(0)
    ks = jax.random.split(key, 20)
    q = jax.random.normal(ks[0], (B, d_model), jnp.float32)
    k = jax.random.normal(ks[1], (B, L, d_model), jnp.float32)
    v = jax.random.normal(ks[2], (B, L, d_model), jnp.float32)
    lengths = jnp.array([L, 5], jnp.int32)
    mask = (jnp.arange(L)[None, :] < lengths[:, None]).astype(jnp.float32)

    def w(kk, i, o):
        return jax.random.normal(kk, (i, o), jnp.float32) * 0.1

    # weights pre-transposed to [in_features, out_features]
    params = {
        "w_qs": w(ks[3], d_model, n_head * d_k),
        "w_ks": w(ks[4], d_model, n_head * d_k),
        "w_vs": w(ks[5], d_model, n_head * d_v),
        "w_fc": w(ks[6], n_head * d_v, d_model),
        "w1": w(ks[7], d_model, d_hid),
        "b1": 0.1 * jax.random.normal(ks[8], (d_hid,), jnp.float32),
        "w2": w(ks[9], d_hid, d_model),
        "b2": 0.1 * jax.random.normal(ks[10], (d_model,), jnp.float32),
        "g1": 1.0 + 0.1 * jax.random.normal(ks[11], (d_model,), jnp.float32),
        "be1": 0.1 * jax.random.normal(ks[12], (d_model,), jnp.float32),
        "g2": 1.0 + 0.1 * jax.random.normal(ks[13], (d_model,), jnp.float32),
        "be2": 0.1 * jax.random.normal(ks[14], (d_model,), jnp.float32),
    }

    out, attn = my_multi_head_attention_forward(
        q, k, v, mask, params, n_head=n_head, d_k=d_k, d_v=d_v)
    out = jax.block_until_ready(out)
    attn = jax.block_until_ready(attn)

    ref_out, ref_attn = reference_forward(
        q, k, v, mask, params, n_head=n_head, d_k=d_k, d_v=d_v)

    assert out.shape == (B, d_model), out.shape
    assert attn.shape == (B, n_head, 1, L), attn.shape
    err_out = float(jnp.max(jnp.abs(out - ref_out)))
    err_attn = float(jnp.max(jnp.abs(attn - ref_attn)))
    # tolerance accommodates bf16 MXU operands (reference is pure f32)
    assert jnp.allclose(out, ref_out, rtol=5e-2, atol=5e-2), err_out
    assert jnp.allclose(attn, ref_attn, rtol=2e-2, atol=2e-2), err_attn
    print("KERNEL_OK")
</pallas_src>

<mosaic_0001>
module attributes {stable_mosaic.version = 11 : i64} {
  func.func @_mha_ffn_kernel(%arg0: i32, %arg1: memref<2x32xbf16, #tpu.memory_space<vmem>>, %arg2: memref<16x32xbf16, #tpu.memory_space<vmem>>, %arg3: memref<16x32xbf16, #tpu.memory_space<vmem>>, %arg4: memref<16x1xf32, #tpu.memory_space<vmem>>, %arg5: memref<32x32xbf16, #tpu.memory_space<vmem>>, %arg6: memref<32x32xbf16, #tpu.memory_space<vmem>>, %arg7: memref<32x32xbf16, #tpu.memory_space<vmem>>, %arg8: memref<32x32xbf16, #tpu.memory_space<vmem>>, %arg9: memref<32x32xbf16, #tpu.memory_space<vmem>>, %arg10: memref<32x32xbf16, #tpu.memory_space<vmem>>, %arg11: memref<8x32xf32, #tpu.memory_space<vmem>>, %arg12: memref<2x32xf32, #tpu.memory_space<vmem>>, %arg13: memref<16x4xf32, #tpu.memory_space<vmem>>) attributes {dimension_semantics = [#tpu.dimension_semantics<parallel>], iteration_bounds = array<i64: 1>, scalar_prefetch = 0 : i64, scratch_operands = 0 : i64, tpu.core_type = #tpu.core_type<tc>, window_params = [{transform_indices = @transform_0, window_bounds = array<i64: 2, 32>}, {transform_indices = @transform_1, window_bounds = array<i64: 16, 32>}, {transform_indices = @transform_2, window_bounds = array<i64: 16, 32>}, {transform_indices = @transform_3, window_bounds = array<i64: 16, 1>}, {pipeline_mode = #tpu.pipeline_mode<synchronous>, transform_indices = @transform_4, window_bounds = array<i64: 32, 32>}, {pipeline_mode = #tpu.pipeline_mode<synchronous>, transform_indices = @transform_5, window_bounds = array<i64: 32, 32>}, {pipeline_mode = #tpu.pipeline_mode<synchronous>, transform_indices = @transform_6, window_bounds = array<i64: 32, 32>}, {pipeline_mode = #tpu.pipeline_mode<synchronous>, transform_indices = @transform_7, window_bounds = array<i64: 32, 32>}, {pipeline_mode = #tpu.pipeline_mode<synchronous>, transform_indices = @transform_8, window_bounds = array<i64: 32, 32>}, {pipeline_mode = #tpu.pipeline_mode<synchronous>, transform_indices = @transform_9, window_bounds = array<i64: 32, 32>}, {pipeline_mode = #tpu.pipeline_mode<synchronous>, transform_indices = @transform_10, window_bounds = array<i64: 8, 32>}, {transform_indices = @transform_11, window_bounds = array<i64: 2, 32>}, {transform_indices = @transform_12, window_bounds = array<i64: 16, 4>}]} {
    %c0 = arith.constant 0 : index
    %c0_0 = arith.constant 0 : index
    %0 = vector.load %arg1[%c0, %c0_0] : memref<2x32xbf16, #tpu.memory_space<vmem>>, vector<2x32xbf16>
    %c0_1 = arith.constant 0 : index
    %c0_2 = arith.constant 0 : index
    %1 = vector.load %arg5[%c0_1, %c0_2] : memref<32x32xbf16, #tpu.memory_space<vmem>>, vector<32x32xbf16>
    %cst = arith.constant dense<0.000000e+00> : vector<2x32xf32>
    %2 = tpu.matmul %0, %1, %cst {dimension_numbers = #tpu.dot_dimension_numbers<[1], [0], [0], [1], [0, 0, 1, 1], [], []>} : vector<2x32xbf16>, vector<32x32xbf16>, vector<2x32xf32> -> vector<2x32xf32>
    %cst_3 = arith.constant 0.353553385 : f32
    %3 = vector.broadcast %cst_3 : f32 to vector<2x32xf32>
    %4 = arith.mulf %2, %3 : vector<2x32xf32>
    %c0_4 = arith.constant 0 : index
    %c0_5 = arith.constant 0 : index
    %5 = vector.load %arg2[%c0_4, %c0_5] : memref<16x32xbf16, #tpu.memory_space<vmem>>, vector<16x32xbf16>
    %c0_6 = arith.constant 0 : index
    %c0_7 = arith.constant 0 : index
    %6 = vector.load %arg6[%c0_6, %c0_7] : memref<32x32xbf16, #tpu.memory_space<vmem>>, vector<32x32xbf16>
    %cst_8 = arith.constant dense<0.000000e+00> : vector<16x32xf32>
    %7 = tpu.matmul %5, %6, %cst_8 {dimension_numbers = #tpu.dot_dimension_numbers<[1], [0], [0], [1], [0, 0, 1, 1], [], []>} : vector<16x32xbf16>, vector<32x32xbf16>, vector<16x32xf32> -> vector<16x32xf32>
    %c0_9 = arith.constant 0 : index
    %c0_10 = arith.constant 0 : index
    %8 = vector.load %arg3[%c0_9, %c0_10] : memref<16x32xbf16, #tpu.memory_space<vmem>>, vector<16x32xbf16>
    %c0_11 = arith.constant 0 : index
    %c0_12 = arith.constant 0 : index
    %9 = vector.load %arg7[%c0_11, %c0_12] : memref<32x32xbf16, #tpu.memory_space<vmem>>, vector<32x32xbf16>
    %cst_13 = arith.constant dense<0.000000e+00> : vector<16x32xf32>
    %10 = tpu.matmul %8, %9, %cst_13 {dimension_numbers = #tpu.dot_dimension_numbers<[1], [0], [0], [1], [0, 0, 1, 1], [], []>} : vector<16x32xbf16>, vector<32x32xbf16>, vector<16x32xf32> -> vector<16x32xf32>
    %11 = tpu.iota {dimensions = array<i32: 0>} : vector<32x4xi32>
    %12 = tpu.iota {dimensions = array<i32: 1>} : vector<32x4xi32>
    %c8_i32 = arith.constant 8 : i32
    %13 = vector.broadcast %c8_i32 : i32 to vector<32x4xi32>
    %14 = arith.muli %12, %13 : vector<32x4xi32>
    %15 = arith.cmpi sge, %11, %14 : vector<32x4xi32>
    %c1_i32 = arith.constant 1 : i32
    %16 = vector.broadcast %c1_i32 : i32 to vector<32x4xi32>
    %17 = arith.addi %12, %16 : vector<32x4xi32>
    %c8_i32_14 = arith.constant 8 : i32
    %18 = vector.broadcast %c8_i32_14 : i32 to vector<32x4xi32>
    %19 = arith.muli %17, %18 : vector<32x4xi32>
    %20 = arith.cmpi slt, %11, %19 : vector<32x4xi32>
    %21 = arith.andi %15, %20 : vector<32x4xi1>
    %22 = arith.extui %21 : vector<32x4xi1> to vector<32x4xi32>
    %23 = arith.sitofp %22 : vector<32x4xi32> to vector<32x4xf32>
    %24 = tpu.iota {dimensions = array<i32: 0>} : vector<4x32xi32>
    %25 = tpu.iota {dimensions = array<i32: 1>} : vector<4x32xi32>
    %c8_i32_15 = arith.constant 8 : i32
    %26 = vector.broadcast %c8_i32_15 : i32 to vector<4x32xi32>
    %27 = arith.muli %24, %26 : vector<4x32xi32>
    %28 = arith.cmpi sge, %25, %27 : vector<4x32xi32>
    %c1_i32_16 = arith.constant 1 : i32
    %29 = vector.broadcast %c1_i32_16 : i32 to vector<4x32xi32>
    %30 = arith.addi %24, %29 : vector<4x32xi32>
    %c8_i32_17 = arith.constant 8 : i32
    %31 = vector.broadcast %c8_i32_17 : i32 to vector<4x32xi32>
    %32 = arith.muli %30, %31 : vector<4x32xi32>
    %33 = arith.cmpi slt, %25, %32 : vector<4x32xi32>
    %34 = arith.andi %28, %33 : vector<4x32xi1>
    %35 = arith.extui %34 : vector<4x32xi1> to vector<4x32xi32>
    %36 = arith.sitofp %35 : vector<4x32xi32> to vector<4x32xf32>
    %37 = vector.shape_cast %4 : vector<2x32xf32> to vector<2x1x32xf32>
    %38 = vector.shape_cast %37 : vector<2x1x32xf32> to vector<2x1x32xf32>
    %39 = vector.broadcast %38 : vector<2x1x32xf32> to vector<2x8x32xf32>
    %40 = vector.shape_cast %39 : vector<2x8x32xf32> to vector<16x32xf32>
    %41 = arith.mulf %40, %7 : vector<16x32xf32>
    %cst_18 = arith.constant dense<0.000000e+00> : vector<16x4xf32>
    %42 = tpu.matmul %41, %23, %cst_18 {dimension_numbers = #tpu.dot_dimension_numbers<[1], [0], [0], [1], [0, 0, 1, 1], [], []>} : vector<16x32xf32>, vector<32x4xf32>, vector<16x4xf32> -> vector<16x4xf32>
    %c0_19 = arith.constant 0 : index
    %c0_20 = arith.constant 0 : index
    %43 = vector.load %arg4[%c0_19, %c0_20] : memref<16x1xf32, #tpu.memory_space<vmem>>, vector<16x1xf32>
    %cst_21 = arith.constant 0.000000e+00 : f32
    %44 = vector.broadcast %cst_21 : f32 to vector<16x1xf32>
    %45 = arith.cmpf ogt, %43, %44 : vector<16x1xf32>
    %cst_22 = arith.constant -1.000000e+09 : f32
    %46 = vector.shape_cast %45 : vector<16x1xi1> to vector<16x1xi1>
    %47 = vector.broadcast %46 : vector<16x1xi1> to vector<16x4xi1>
    %48 = vector.broadcast %cst_22 : f32 to vector<16x4xf32>
    %49 = arith.select %47, %42, %48 : vector<16x4xi1>, vector<16x4xf32>
    %50 = vector.shape_cast %49 : vector<16x4xf32> to vector<2x8x4xf32>
    %cst_23 = arith.constant dense<0xFF800000> : vector<2x4xf32>
    %51 = vector.multi_reduction <maximumf>, %50, %cst_23 [1] : vector<2x8x4xf32> to vector<2x4xf32>
    %52 = vector.shape_cast %51 : vector<2x4xf32> to vector<2x1x4xf32>
    %53 = vector.broadcast %52 : vector<2x1x4xf32> to vector<2x8x4xf32>
    %54 = arith.subf %50, %53 : vector<2x8x4xf32>
    %55 = math.exp %54 : vector<2x8x4xf32>
    %cst_24 = arith.constant dense<0.000000e+00> : vector<2x4xf32>
    %56 = vector.multi_reduction <add>, %55, %cst_24 [1] : vector<2x8x4xf32> to vector<2x4xf32>
    %57 = vector.shape_cast %56 : vector<2x4xf32> to vector<2x1x4xf32>
    %58 = vector.broadcast %57 : vector<2x1x4xf32> to vector<2x8x4xf32>
    %59 = arith.divf %55, %58 : vector<2x8x4xf32>
    %60 = vector.shape_cast %59 : vector<2x8x4xf32> to vector<16x4xf32>
    %c0_25 = arith.constant 0 : index
    %c0_26 = arith.constant 0 : index
    %61 = vector.load %arg13[%c0_25, %c0_26] : memref<16x4xf32, #tpu.memory_space<vmem>>, vector<16x4xf32>
    tpu.vector_store %arg13[%c0_25, %c0_26], %60 {strides = array<i32>} : memref<16x4xf32, #tpu.memory_space<vmem>>, vector<16x4xf32>,
    %cst_27 = arith.constant dense<0.000000e+00> : vector<16x32xf32>
    %62 = tpu.matmul %60, %36, %cst_27 {dimension_numbers = #tpu.dot_dimension_numbers<[1], [0], [0], [1], [0, 0, 1, 1], [], []>} : vector<16x4xf32>, vector<4x32xf32>, vector<16x32xf32> -> vector<16x32xf32>
    %63 = arith.mulf %62, %10 : vector<16x32xf32>
    %64 = vector.shape_cast %63 : vector<16x32xf32> to vector<2x8x32xf32>
    %cst_28 = arith.constant dense<0.000000e+00> : vector<2x32xf32>
    %65 = vector.multi_reduction <add>, %64, %cst_28 [1] : vector<2x8x32xf32> to vector<2x32xf32>
    %c0_29 = arith.constant 0 : index
    %c0_30 = arith.constant 0 : index
    %66 = vector.load %arg11[%c0_29, %c0_30] : memref<8x32xf32, #tpu.memory_space<vmem>>, vector<8x32xf32>
    %67 = vector.extract_strided_slice %66 {offsets = [0, 0], sizes = [1, 32], strides = [1, 1]} : vector<8x32xf32> to vector<1x32xf32>
    %68 = vector.extract_strided_slice %66 {offsets = [1, 0], sizes = [1, 32], strides = [1, 1]} : vector<8x32xf32> to vector<1x32xf32>
    %69 = vector.extract_strided_slice %66 {offsets = [2, 0], sizes = [1, 32], strides = [1, 1]} : vector<8x32xf32> to vector<1x32xf32>
    %70 = vector.extract_strided_slice %66 {offsets = [3, 0], sizes = [1, 32], strides = [1, 1]} : vector<8x32xf32> to vector<1x32xf32>
    %71 = vector.extract_strided_slice %66 {offsets = [4, 0], sizes = [1, 32], strides = [1, 1]} : vector<8x32xf32> to vector<1x32xf32>
    %72 = vector.extract_strided_slice %66 {offsets = [5, 0], sizes = [1, 32], strides = [1, 1]} : vector<8x32xf32> to vector<1x32xf32>
    %c0_31 = arith.constant 0 : index
    %c0_32 = arith.constant 0 : index
    %73 = vector.load %arg1[%c0_31, %c0_32] : memref<2x32xbf16, #tpu.memory_space<vmem>>, vector<2x32xbf16>
    %74 = arith.extf %73 : vector<2x32xbf16> to vector<2x32xf32>
    %75 = arith.truncf %65 : vector<2x32xf32> to vector<2x32xbf16>
    %c0_33 = arith.constant 0 : index
    %c0_34 = arith.constant 0 : index
    %76 = vector.load %arg8[%c0_33, %c0_34] : memref<32x32xbf16, #tpu.memory_space<vmem>>, vector<32x32xbf16>
    %cst_35 = arith.constant dense<0.000000e+00> : vector<2x32xf32>
    %77 = tpu.matmul %75, %76, %cst_35 {dimension_numbers = #tpu.dot_dimension_numbers<[1], [0], [0], [1], [0, 0, 1, 1], [], []>} : vector<2x32xbf16>, vector<32x32xbf16>, vector<2x32xf32> -> vector<2x32xf32>
    %78 = arith.addf %77, %74 : vector<2x32xf32>
    %cst_36 = arith.constant dense<0.000000e+00> : vector<2xf32>
    %79 = vector.multi_reduction <add>, %78, %cst_36 [1] : vector<2x32xf32> to vector<2xf32>
    %80 = vector.shape_cast %79 : vector<2xf32> to vector<2x1xf32>
    %cst_37 = arith.constant 3.200000e+01 : f32
    %81 = vector.broadcast %cst_37 : f32 to vector<2x1xf32>
    %82 = arith.divf %80, %81 : vector<2x1xf32>
    %83 = vector.broadcast %82 : vector<2x1xf32> to vector<2x32xf32>
    %84 = arith.subf %78, %83 : vector<2x32xf32>
    %85 = arith.mulf %84, %84 : vector<2x32xf32>
    %cst_38 = arith.constant dense<0.000000e+00> : vector<2xf32>
    %86 = vector.multi_reduction <add>, %85, %cst_38 [1] : vector<2x32xf32> to vector<2xf32>
    %87 = vector.shape_cast %86 : vector<2xf32> to vector<2x1xf32>
    %cst_39 = arith.constant 3.200000e+01 : f32
    %88 = vector.broadcast %cst_39 : f32 to vector<2x1xf32>
    %89 = arith.divf %87, %88 : vector<2x1xf32>
    %cst_40 = arith.constant 9.99999997E-7 : f32
    %90 = vector.broadcast %cst_40 : f32 to vector<2x1xf32>
    %91 = arith.addf %89, %90 : vector<2x1xf32>
    %92 = math.rsqrt %91 : vector<2x1xf32>
    %93 = vector.broadcast %92 : vector<2x1xf32> to vector<2x32xf32>
    %94 = arith.mulf %84, %93 : vector<2x32xf32>
    %95 = vector.broadcast %69 : vector<1x32xf32> to vector<2x32xf32>
    %96 = arith.mulf %94, %95 : vector<2x32xf32>
    %97 = vector.broadcast %70 : vector<1x32xf32> to vector<2x32xf32>
    %98 = arith.addf %96, %97 : vector<2x32xf32>
    %99 = arith.truncf %98 : vector<2x32xf32> to vector<2x32xbf16>
    %c0_41 = arith.constant 0 : index
    %c0_42 = arith.constant 0 : index
    %100 = vector.load %arg9[%c0_41, %c0_42] : memref<32x32xbf16, #tpu.memory_space<vmem>>, vector<32x32xbf16>
    %cst_43 = arith.constant dense<0.000000e+00> : vector<2x32xf32>
    %101 = tpu.matmul %99, %100, %cst_43 {dimension_numbers = #tpu.dot_dimension_numbers<[1], [0], [0], [1], [0, 0, 1, 1], [], []>} : vector<2x32xbf16>, vector<32x32xbf16>, vector<2x32xf32> -> vector<2x32xf32>
    %102 = vector.broadcast %67 : vector<1x32xf32> to vector<2x32xf32>
    %103 = arith.addf %101, %102 : vector<2x32xf32>
    %cst_44 = arith.constant 0.000000e+00 : f32
    %104 = vector.broadcast %cst_44 : f32 to vector<2x32xf32>
    %105 = arith.maximumf %103, %104 : vector<2x32xf32>
    %106 = arith.truncf %105 : vector<2x32xf32> to vector<2x32xbf16>
    %c0_45 = arith.constant 0 : index
    %c0_46 = arith.constant 0 : index
    %107 = vector.load %arg10[%c0_45, %c0_46] : memref<32x32xbf16, #tpu.memory_space<vmem>>, vector<32x32xbf16>
    %cst_47 = arith.constant dense<0.000000e+00> : vector<2x32xf32>
    %108 = tpu.matmul %106, %107, %cst_47 {dimension_numbers = #tpu.dot_dimension_numbers<[1], [0], [0], [1], [0, 0, 1, 1], [], []>} : vector<2x32xbf16>, vector<32x32xbf16>, vector<2x32xf32> -> vector<2x32xf32>
    %109 = vector.broadcast %68 : vector<1x32xf32> to vector<2x32xf32>
    %110 = arith.addf %108, %109 : vector<2x32xf32>
    %111 = arith.addf %110, %98 : vector<2x32xf32>
    %cst_48 = arith.constant dense<0.000000e+00> : vector<2xf32>
    %112 = vector.multi_reduction <add>, %111, %cst_48 [1] : vector<2x32xf32> to vector<2xf32>
    %113 = vector.shape_cast %112 : vector<2xf32> to vector<2x1xf32>
    %cst_49 = arith.constant 3.200000e+01 : f32
    %114 = vector.broadcast %cst_49 : f32 to vector<2x1xf32>
    %115 = arith.divf %113, %114 : vector<2x1xf32>
    %116 = vector.broadcast %115 : vector<2x1xf32> to vector<2x32xf32>
    %117 = arith.subf %111, %116 : vector<2x32xf32>
    %118 = arith.mulf %117, %117 : vector<2x32xf32>
    %cst_50 = arith.constant dense<0.000000e+00> : vector<2xf32>
    %119 = vector.multi_reduction <add>, %118, %cst_50 [1] : vector<2x32xf32> to vector<2xf32>
    %120 = vector.shape_cast %119 : vector<2xf32> to vector<2x1xf32>
    %cst_51 = arith.constant 3.200000e+01 : f32
    %121 = vector.broadcast %cst_51 : f32 to vector<2x1xf32>
    %122 = arith.divf %120, %121 : vector<2x1xf32>
    %cst_52 = arith.constant 9.99999997E-7 : f32
    %123 = vector.broadcast %cst_52 : f32 to vector<2x1xf32>
    %124 = arith.addf %122, %123 : vector<2x1xf32>
    %125 = math.rsqrt %124 : vector<2x1xf32>
    %126 = vector.broadcast %125 : vector<2x1xf32> to vector<2x32xf32>
    %127 = arith.mulf %117, %126 : vector<2x32xf32>
    %128 = vector.broadcast %71 : vector<1x32xf32> to vector<2x32xf32>
    %129 = arith.mulf %127, %128 : vector<2x32xf32>
    %130 = vector.broadcast %72 : vector<1x32xf32> to vector<2x32xf32>
    %131 = arith.addf %129, %130 : vector<2x32xf32>
    %c0_53 = arith.constant 0 : index
    %c0_54 = arith.constant 0 : index
    %132 = vector.load %arg12[%c0_53, %c0_54] : memref<2x32xf32, #tpu.memory_space<vmem>>, vector<2x32xf32>
    tpu.vector_store %arg12[%c0_53, %c0_54], %131 {strides = array<i32>} : memref<2x32xf32, #tpu.memory_space<vmem>>, vector<2x32xf32>,
    return
  }
  func.func @transform_0(%arg0: i32) -> (i32, i32) {
    %c0_i32 = arith.constant 0 : i32
    %c0_i32_0 = arith.constant 0 : i32
    return %arg0, %c0_i32 : i32, i32
  }
  func.func @transform_1(%arg0: i32) -> (i32, i32) {
    %c0_i32 = arith.constant 0 : i32
    %c0_i32_0 = arith.constant 0 : i32
    return %arg0, %c0_i32 : i32, i32
  }
  func.func @transform_2(%arg0: i32) -> (i32, i32) {
    %c0_i32 = arith.constant 0 : i32
    %c0_i32_0 = arith.constant 0 : i32
    return %arg0, %c0_i32 : i32, i32
  }
  func.func @transform_3(%arg0: i32) -> (i32, i32) {
    %c0_i32 = arith.constant 0 : i32
    %c0_i32_0 = arith.constant 0 : i32
    return %arg0, %c0_i32 : i32, i32
  }
  func.func @transform_4(%arg0: i32) -> (i32, i32) {
    %c0_i32 = arith.constant 0 : i32
    %c0_i32_0 = arith.constant 0 : i32
    %c0_i32_1 = arith.constant 0 : i32
    return %c0_i32, %c0_i32_0 : i32, i32
  }
  func.func @transform_5(%arg0: i32) -> (i32, i32) {
    %c0_i32 = arith.constant 0 : i32
    %c0_i32_0 = arith.constant 0 : i32
    %c0_i32_1 = arith.constant 0 : i32
    return %c0_i32, %c0_i32_0 : i32, i32
  }
  func.func @transform_6(%arg0: i32) -> (i32, i32) {
    %c0_i32 = arith.constant 0 : i32
    %c0_i32_0 = arith.constant 0 : i32
    %c0_i32_1 = arith.constant 0 : i32
    return %c0_i32, %c0_i32_0 : i32, i32
  }
  func.func @transform_7(%arg0: i32) -> (i32, i32) {
    %c0_i32 = arith.constant 0 : i32
    %c0_i32_0 = arith.constant 0 : i32
    %c0_i32_1 = arith.constant 0 : i32
    return %c0_i32, %c0_i32_0 : i32, i32
  }
  func.func @transform_8(%arg0: i32) -> (i32, i32) {
    %c0_i32 = arith.constant 0 : i32
    %c0_i32_0 = arith.constant 0 : i32
    %c0_i32_1 = arith.constant 0 : i32
    return %c0_i32, %c0_i32_0 : i32, i32
  }
  func.func @transform_9(%arg0: i32) -> (i32, i32) {
    %c0_i32 = arith.constant 0 : i32
    %c0_i32_0 = arith.constant 0 : i32
    %c0_i32_1 = arith.constant 0 : i32
    return %c0_i32, %c0_i32_0 : i32, i32
  }
  func.func @transform_10(%arg0: i32) -> (i32, i32) {
    %c0_i32 = arith.constant 0 : i32
    %c0_i32_0 = arith.constant 0 : i32
    %c0_i32_1 = arith.constant 0 : i32
    return %c0_i32, %c0_i32_0 : i32, i32
  }
  func.func @transform_11(%arg0: i32) -> (i32, i32) {
    %c0_i32 = arith.constant 0 : i32
    %c0_i32_0 = arith.constant 0 : i32
    return %arg0, %c0_i32 : i32, i32
  }
  func.func @transform_12(%arg0: i32) -> (i32, i32) {
    %c0_i32 = arith.constant 0 : i32
    %c0_i32_0 = arith.constant 0 : i32
    return %arg0, %c0_i32 : i32, i32
  }
}

module attributes {stable_mosaic.version = 11 : i64} {
  func.func @_mha_ffn_kernel(%arg0: i32, %arg1: memref<2x32xbf16, #tpu.memory_space<vmem>>, %arg2: memref<16x32xbf16, #tpu.memory_space<vmem>>, %arg3: memref<16x32xbf16, #tpu.memory_space<vmem>>, %arg4: memref<16x1xf32, #tpu.memory_space<vmem>>, %arg5: memref<32x32xbf16, #tpu.memory_space<vmem>>, %arg6: memref<32x32xbf16, #tpu.memory_space<vmem>>, %arg7: memref<32x32xbf16, #tpu.memory_space<vmem>>, %arg8: memref<32x32xbf16, #tpu.memory_space<vmem>>, %arg9: memref<32x32xbf16, #tpu.memory_space<vmem>>, %arg10: memref<32x32xbf16, #tpu.memory_space<vmem>>, %arg11: memref<8x32xf32, #tpu.memory_space<vmem>>, %arg12: memref<2x32xf32, #tpu.memory_space<vmem>>, %arg13: memref<16x4xf32, #tpu.memory_space<vmem>>) attributes {dimension_semantics = [#tpu.dimension_semantics<parallel>], iteration_bounds = array<i64: 1>, scalar_prefetch = 0 : i64, scratch_operands = 0 : i64, tpu.core_type = #tpu.core_type<tc>, window_params = [{transform_indices = @transform_0, window_bounds = array<i64: 2, 32>}, {transform_indices = @transform_1, window_bounds = array<i64: 16, 32>}, {transform_indices = @transform_2, window_bounds = array<i64: 16, 32>}, {transform_indices = @transform_3, window_bounds = array<i64: 16, 1>}, {pipeline_mode = #tpu.pipeline_mode<synchronous>, transform_indices = @transform_4, window_bounds = array<i64: 32, 32>}, {pipeline_mode = #tpu.pipeline_mode<synchronous>, transform_indices = @transform_5, window_bounds = array<i64: 32, 32>}, {pipeline_mode = #tpu.pipeline_mode<synchronous>, transform_indices = @transform_6, window_bounds = array<i64: 32, 32>}, {pipeline_mode = #tpu.pipeline_mode<synchronous>, transform_indices = @transform_7, window_bounds = array<i64: 32, 32>}, {pipeline_mode = #tpu.pipeline_mode<synchronous>, transform_indices = @transform_8, window_bounds = array<i64: 32, 32>}, {pipeline_mode = #tpu.pipeline_mode<synchronous>, transform_indices = @transform_9, window_bounds = array<i64: 32, 32>}, {pipeline_mode = #tpu.pipeline_mode<synchronous>, transform_indices = @transform_10, window_bounds = array<i64: 8, 32>}, {transform_indices = @transform_11, window_bounds = array<i64: 2, 32>}, {transform_indices = @transform_12, window_bounds = array<i64: 16, 4>}]} {
    %c0 = arith.constant 0 : index
    %c0_0 = arith.constant 0 : index
    %0 = vector.load %arg1[%c0, %c0_0] : memref<2x32xbf16, #tpu.memory_space<vmem>>, vector<2x32xbf16>
    %c0_1 = arith.constant 0 : index
    %c0_2 = arith.constant 0 : index
    %1 = vector.load %arg5[%c0_1, %c0_2] : memref<32x32xbf16, #tpu.memory_space<vmem>>, vector<32x32xbf16>
    %cst = arith.constant dense<0.000000e+00> : vector<2x32xf32>
    %2 = tpu.matmul %0, %1, %cst {dimension_numbers = #tpu.dot_dimension_numbers<[1], [0], [0], [1], [0, 0, 1, 1], [], []>} : vector<2x32xbf16>, vector<32x32xbf16>, vector<2x32xf32> -> vector<2x32xf32>
    %cst_3 = arith.constant 0.353553385 : f32
    %3 = vector.broadcast %cst_3 : f32 to vector<2x32xf32>
    %4 = arith.mulf %2, %3 : vector<2x32xf32>
    %c0_4 = arith.constant 0 : index
    %c0_5 = arith.constant 0 : index
    %5 = vector.load %arg2[%c0_4, %c0_5] : memref<16x32xbf16, #tpu.memory_space<vmem>>, vector<16x32xbf16>
    %c0_6 = arith.constant 0 : index
    %c0_7 = arith.constant 0 : index
    %6 = vector.load %arg6[%c0_6, %c0_7] : memref<32x32xbf16, #tpu.memory_space<vmem>>, vector<32x32xbf16>
    %cst_8 = arith.constant dense<0.000000e+00> : vector<16x32xf32>
    %7 = tpu.matmul %5, %6, %cst_8 {dimension_numbers = #tpu.dot_dimension_numbers<[1], [0], [0], [1], [0, 0, 1, 1], [], []>} : vector<16x32xbf16>, vector<32x32xbf16>, vector<16x32xf32> -> vector<16x32xf32>
    %c0_9 = arith.constant 0 : index
    %c0_10 = arith.constant 0 : index
    %8 = vector.load %arg3[%c0_9, %c0_10] : memref<16x32xbf16, #tpu.memory_space<vmem>>, vector<16x32xbf16>
    %c0_11 = arith.constant 0 : index
    %c0_12 = arith.constant 0 : index
    %9 = vector.load %arg7[%c0_11, %c0_12] : memref<32x32xbf16, #tpu.memory_space<vmem>>, vector<32x32xbf16>
    %cst_13 = arith.constant dense<0.000000e+00> : vector<16x32xf32>
    %10 = tpu.matmul %8, %9, %cst_13 {dimension_numbers = #tpu.dot_dimension_numbers<[1], [0], [0], [1], [0, 0, 1, 1], [], []>} : vector<16x32xbf16>, vector<32x32xbf16>, vector<16x32xf32> -> vector<16x32xf32>
    %11 = tpu.iota {dimensions = array<i32: 0>} : vector<32x4xi32>
    %12 = tpu.iota {dimensions = array<i32: 1>} : vector<32x4xi32>
    %c8_i32 = arith.constant 8 : i32
    %13 = vector.broadcast %c8_i32 : i32 to vector<32x4xi32>
    %14 = arith.muli %12, %13 : vector<32x4xi32>
    %15 = arith.cmpi sge, %11, %14 : vector<32x4xi32>
    %c1_i32 = arith.constant 1 : i32
    %16 = vector.broadcast %c1_i32 : i32 to vector<32x4xi32>
    %17 = arith.addi %12, %16 : vector<32x4xi32>
    %c8_i32_14 = arith.constant 8 : i32
    %18 = vector.broadcast %c8_i32_14 : i32 to vector<32x4xi32>
    %19 = arith.muli %17, %18 : vector<32x4xi32>
    %20 = arith.cmpi slt, %11, %19 : vector<32x4xi32>
    %21 = arith.andi %15, %20 : vector<32x4xi1>
    %22 = arith.extui %21 : vector<32x4xi1> to vector<32x4xi32>
    %23 = arith.sitofp %22 : vector<32x4xi32> to vector<32x4xf32>
    %24 = tpu.iota {dimensions = array<i32: 0>} : vector<4x32xi32>
    %25 = tpu.iota {dimensions = array<i32: 1>} : vector<4x32xi32>
    %c8_i32_15 = arith.constant 8 : i32
    %26 = vector.broadcast %c8_i32_15 : i32 to vector<4x32xi32>
    %27 = arith.muli %24, %26 : vector<4x32xi32>
    %28 = arith.cmpi sge, %25, %27 : vector<4x32xi32>
    %c1_i32_16 = arith.constant 1 : i32
    %29 = vector.broadcast %c1_i32_16 : i32 to vector<4x32xi32>
    %30 = arith.addi %24, %29 : vector<4x32xi32>
    %c8_i32_17 = arith.constant 8 : i32
    %31 = vector.broadcast %c8_i32_17 : i32 to vector<4x32xi32>
    %32 = arith.muli %30, %31 : vector<4x32xi32>
    %33 = arith.cmpi slt, %25, %32 : vector<4x32xi32>
    %34 = arith.andi %28, %33 : vector<4x32xi1>
    %35 = arith.extui %34 : vector<4x32xi1> to vector<4x32xi32>
    %36 = arith.sitofp %35 : vector<4x32xi32> to vector<4x32xf32>
    %37 = vector.shape_cast %4 : vector<2x32xf32> to vector<2x1x32xf32>
    %38 = vector.shape_cast %37 : vector<2x1x32xf32> to vector<2x1x32xf32>
    %39 = vector.broadcast %38 : vector<2x1x32xf32> to vector<2x8x32xf32>
    %40 = vector.shape_cast %39 : vector<2x8x32xf32> to vector<16x32xf32>
    %41 = arith.mulf %40, %7 : vector<16x32xf32>
    %cst_18 = arith.constant dense<0.000000e+00> : vector<16x4xf32>
    %42 = tpu.matmul %41, %23, %cst_18 {dimension_numbers = #tpu.dot_dimension_numbers<[1], [0], [0], [1], [0, 0, 1, 1], [], []>} : vector<16x32xf32>, vector<32x4xf32>, vector<16x4xf32> -> vector<16x4xf32>
    %c0_19 = arith.constant 0 : index
    %c0_20 = arith.constant 0 : index
    %43 = vector.load %arg4[%c0_19, %c0_20] : memref<16x1xf32, #tpu.memory_space<vmem>>, vector<16x1xf32>
    %cst_21 = arith.constant 0.000000e+00 : f32
    %44 = vector.broadcast %cst_21 : f32 to vector<16x1xf32>
    %45 = arith.cmpf ogt, %43, %44 : vector<16x1xf32>
    %cst_22 = arith.constant -1.000000e+09 : f32
    %46 = vector.shape_cast %45 : vector<16x1xi1> to vector<16x1xi1>
    %47 = vector.broadcast %46 : vector<16x1xi1> to vector<16x4xi1>
    %48 = vector.broadcast %cst_22 : f32 to vector<16x4xf32>
    %49 = arith.select %47, %42, %48 : vector<16x4xi1>, vector<16x4xf32>
    %50 = vector.shape_cast %49 : vector<16x4xf32> to vector<2x8x4xf32>
    %cst_23 = arith.constant dense<0xFF800000> : vector<2x4xf32>
    %51 = vector.multi_reduction <maximumf>, %50, %cst_23 [1] : vector<2x8x4xf32> to vector<2x4xf32>
    %52 = vector.shape_cast %51 : vector<2x4xf32> to vector<2x1x4xf32>
    %53 = vector.broadcast %52 : vector<2x1x4xf32> to vector<2x8x4xf32>
    %54 = arith.subf %50, %53 : vector<2x8x4xf32>
    %55 = math.exp %54 : vector<2x8x4xf32>
    %cst_24 = arith.constant dense<0.000000e+00> : vector<2x4xf32>
    %56 = vector.multi_reduction <add>, %55, %cst_24 [1] : vector<2x8x4xf32> to vector<2x4xf32>
    %57 = vector.shape_cast %56 : vector<2x4xf32> to vector<2x1x4xf32>
    %58 = vector.broadcast %57 : vector<2x1x4xf32> to vector<2x8x4xf32>
    %59 = arith.divf %55, %58 : vector<2x8x4xf32>
    %60 = vector.shape_cast %59 : vector<2x8x4xf32> to vector<16x4xf32>
    %c0_25 = arith.constant 0 : index
    %c0_26 = arith.constant 0 : index
    %61 = vector.load %arg13[%c0_25, %c0_26] : memref<16x4xf32, #tpu.memory_space<vmem>>, vector<16x4xf32>
    tpu.vector_store %arg13[%c0_25, %c0_26], %60 {strides = array<i32>} : memref<16x4xf32, #tpu.memory_space<vmem>>, vector<16x4xf32>,
    %cst_27 = arith.constant dense<0.000000e+00> : vector<16x32xf32>
    %62 = tpu.matmul %60, %36, %cst_27 {dimension_numbers = #tpu.dot_dimension_numbers<[1], [0], [0], [1], [0, 0, 1, 1], [], []>} : vector<16x4xf32>, vector<4x32xf32>, vector<16x32xf32> -> vector<16x32xf32>
    %63 = arith.mulf %62, %10 : vector<16x32xf32>
    %64 = vector.shape_cast %63 : vector<16x32xf32> to vector<2x8x32xf32>
    %cst_28 = arith.constant dense<0.000000e+00> : vector<2x32xf32>
    %65 = vector.multi_reduction <add>, %64, %cst_28 [1] : vector<2x8x32xf32> to vector<2x32xf32>
    %c0_29 = arith.constant 0 : index
    %c0_30 = arith.constant 0 : index
    %66 = vector.load %arg11[%c0_29, %c0_30] : memref<8x32xf32, #tpu.memory_space<vmem>>, vector<8x32xf32>
    %67 = vector.extract_strided_slice %66 {offsets = [0, 0], sizes = [1, 32], strides = [1, 1]} : vector<8x32xf32> to vector<1x32xf32>
    %68 = vector.extract_strided_slice %66 {offsets = [1, 0], sizes = [1, 32], strides = [1, 1]} : vector<8x32xf32> to vector<1x32xf32>
    %69 = vector.extract_strided_slice %66 {offsets = [2, 0], sizes = [1, 32], strides = [1, 1]} : vector<8x32xf32> to vector<1x32xf32>
    %70 = vector.extract_strided_slice %66 {offsets = [3, 0], sizes = [1, 32], strides = [1, 1]} : vector<8x32xf32> to vector<1x32xf32>
    %71 = vector.extract_strided_slice %66 {offsets = [4, 0], sizes = [1, 32], strides = [1, 1]} : vector<8x32xf32> to vector<1x32xf32>
    %72 = vector.extract_strided_slice %66 {offsets = [5, 0], sizes = [1, 32], strides = [1, 1]} : vector<8x32xf32> to vector<1x32xf32>
    %c0_31 = arith.constant 0 : index
    %c0_32 = arith.constant 0 : index
    %73 = vector.load %arg1[%c0_31, %c0_32] : memref<2x32xbf16, #tpu.memory_space<vmem>>, vector<2x32xbf16>
    %74 = arith.extf %73 : vector<2x32xbf16> to vector<2x32xf32>
    %75 = arith.truncf %65 : vector<2x32xf32> to vector<2x32xbf16>
    %c0_33 = arith.constant 0 : index
    %c0_34 = arith.constant 0 : index
    %76 = vector.load %arg8[%c0_33, %c0_34] : memref<32x32xbf16, #tpu.memory_space<vmem>>, vector<32x32xbf16>
    %cst_35 = arith.constant dense<0.000000e+00> : vector<2x32xf32>
    %77 = tpu.matmul %75, %76, %cst_35 {dimension_numbers = #tpu.dot_dimension_numbers<[1], [0], [0], [1], [0, 0, 1, 1], [], []>} : vector<2x32xbf16>, vector<32x32xbf16>, vector<2x32xf32> -> vector<2x32xf32>
    %78 = arith.addf %77, %74 : vector<2x32xf32>
    %cst_36 = arith.constant dense<0.000000e+00> : vector<2xf32>
    %79 = vector.multi_reduction <add>, %78, %cst_36 [1] : vector<2x32xf32> to vector<2xf32>
    %80 = vector.shape_cast %79 : vector<2xf32> to vector<2x1xf32>
    %cst_37 = arith.constant 3.200000e+01 : f32
    %81 = vector.broadcast %cst_37 : f32 to vector<2x1xf32>
    %82 = arith.divf %80, %81 : vector<2x1xf32>
    %83 = vector.broadcast %82 : vector<2x1xf32> to vector<2x32xf32>
    %84 = arith.subf %78, %83 : vector<2x32xf32>
    %85 = arith.mulf %84, %84 : vector<2x32xf32>
    %cst_38 = arith.constant dense<0.000000e+00> : vector<2xf32>
    %86 = vector.multi_reduction <add>, %85, %cst_38 [1] : vector<2x32xf32> to vector<2xf32>
    %87 = vector.shape_cast %86 : vector<2xf32> to vector<2x1xf32>
    %cst_39 = arith.constant 3.200000e+01 : f32
    %88 = vector.broadcast %cst_39 : f32 to vector<2x1xf32>
    %89 = arith.divf %87, %88 : vector<2x1xf32>
    %cst_40 = arith.constant 9.99999997E-7 : f32
    %90 = vector.broadcast %cst_40 : f32 to vector<2x1xf32>
    %91 = arith.addf %89, %90 : vector<2x1xf32>
    %92 = math.rsqrt %91 : vector<2x1xf32>
    %93 = vector.broadcast %92 : vector<2x1xf32> to vector<2x32xf32>
    %94 = arith.mulf %84, %93 : vector<2x32xf32>
    %95 = vector.broadcast %69 : vector<1x32xf32> to vector<2x32xf32>
    %96 = arith.mulf %94, %95 : vector<2x32xf32>
    %97 = vector.broadcast %70 : vector<1x32xf32> to vector<2x32xf32>
    %98 = arith.addf %96, %97 : vector<2x32xf32>
    %99 = arith.truncf %98 : vector<2x32xf32> to vector<2x32xbf16>
    %c0_41 = arith.constant 0 : index
    %c0_42 = arith.constant 0 : index
    %100 = vector.load %arg9[%c0_41, %c0_42] : memref<32x32xbf16, #tpu.memory_space<vmem>>, vector<32x32xbf16>
    %cst_43 = arith.constant dense<0.000000e+00> : vector<2x32xf32>
    %101 = tpu.matmul %99, %100, %cst_43 {dimension_numbers = #tpu.dot_dimension_numbers<[1], [0], [0], [1], [0, 0, 1, 1], [], []>} : vector<2x32xbf16>, vector<32x32xbf16>, vector<2x32xf32> -> vector<2x32xf32>
    %102 = vector.broadcast %67 : vector<1x32xf32> to vector<2x32xf32>
    %103 = arith.addf %101, %102 : vector<2x32xf32>
    %cst_44 = arith.constant 0.000000e+00 : f32
    %104 = vector.broadcast %cst_44 : f32 to vector<2x32xf32>
    %105 = arith.maximumf %103, %104 : vector<2x32xf32>
    %106 = arith.truncf %105 : vector<2x32xf32> to vector<2x32xbf16>
    %c0_45 = arith.constant 0 : index
    %c0_46 = arith.constant 0 : index
    %107 = vector.load %arg10[%c0_45, %c0_46] : memref<32x32xbf16, #tpu.memory_space<vmem>>, vector<32x32xbf16>
    %cst_47 = arith.constant dense<0.000000e+00> : vector<2x32xf32>
    %108 = tpu.matmul %106, %107, %cst_47 {dimension_numbers = #tpu.dot_dimension_numbers<[1], [0], [0], [1], [0, 0, 1, 1], [], []>} : vector<2x32xbf16>, vector<32x32xbf16>, vector<2x32xf32> -> vector<2x32xf32>
    %109 = vector.broadcast %68 : vector<1x32xf32> to vector<2x32xf32>
    %110 = arith.addf %108, %109 : vector<2x32xf32>
    %111 = arith.addf %110, %98 : vector<2x32xf32>
    %cst_48 = arith.constant dense<0.000000e+00> : vector<2xf32>
    %112 = vector.multi_reduction <add>, %111, %cst_48 [1] : vector<2x32xf32> to vector<2xf32>
    %113 = vector.shape_cast %112 : vector<2xf32> to vector<2x1xf32>
    %cst_49 = arith.constant 3.200000e+01 : f32
    %114 = vector.broadcast %cst_49 : f32 to vector<2x1xf32>
    %115 = arith.divf %113, %114 : vector<2x1xf32>
    %116 = vector.broadcast %115 : vector<2x1xf32> to vector<2x32xf32>
    %117 = arith.subf %111, %116 : vector<2x32xf32>
    %118 = arith.mulf %117, %117 : vector<2x32xf32>
    %cst_50 = arith.constant dense<0.000000e+00> : vector<2xf32>
    %119 = vector.multi_reduction <add>, %118, %cst_50 [1] : vector<2x32xf32> to vector<2xf32>
    %120 = vector.shape_cast %119 : vector<2xf32> to vector<2x1xf32>
    %cst_51 = arith.constant 3.200000e+01 : f32
    %121 = vector.broadcast %cst_51 : f32 to vector<2x1xf32>
    %122 = arith.divf %120, %121 : vector<2x1xf32>
    %cst_52 = arith.constant 9.99999997E-7 : f32
    %123 = vector.broadcast %cst_52 : f32 to vector<2x1xf32>
    %124 = arith.addf %122, %123 : vector<2x1xf32>
    %125 = math.rsqrt %124 : vector<2x1xf32>
    %126 = vector.broadcast %125 : vector<2x1xf32> to vector<2x32xf32>
    %127 = arith.mulf %117, %126 : vector<2x32xf32>
    %128 = vector.broadcast %71 : vector<1x32xf32> to vector<2x32xf32>
    %129 = arith.mulf %127, %128 : vector<2x32xf32>
    %130 = vector.broadcast %72 : vector<1x32xf32> to vector<2x32xf32>
    %131 = arith.addf %129, %130 : vector<2x32xf32>
    %c0_53 = arith.constant 0 : index
    %c0_54 = arith.constant 0 : index
    %132 = vector.load %arg12[%c0_53, %c0_54] : memref<2x32xf32, #tpu.memory_space<vmem>>, vector<2x32xf32>
    tpu.vector_store %arg12[%c0_53, %c0_54], %131 {strides = array<i32>} : memref<2x32xf32, #tpu.memory_space<vmem>>, vector<2x32xf32>,
    return
  }
  func.func @transform_0(%arg0: i32) -> (i32, i32) {
    %c0_i32 = arith.constant 0 : i32
    %c0_i32_0 = arith.constant 0 : i32
    return %arg0, %c0_i32 : i32, i32
  }
  func.func @transform_1(%arg0: i32) -> (i32, i32) {
    %c0_i32 = arith.constant 0 : i32
    %c0_i32_0 = arith.constant 0 : i32
    return %arg0, %c0_i32 : i32, i32
  }
  func.func @transform_2(%arg0: i32) -> (i32, i32) {
    %c0_i32 = arith.constant 0 : i32
    %c0_i32_0 = arith.constant 0 : i32
    return %arg0, %c0_i32 : i32, i32
  }
  func.func @transform_3(%arg0: i32) -> (i32, i32) {
    %c0_i32 = arith.constant 0 : i32
    %c0_i32_0 = arith.constant 0 : i32
    return %arg0, %c0_i32 : i32, i32
  }
  func.func @transform_4(%arg0: i32) -> (i32, i32) {
    %c0_i32 = arith.constant 0 : i32
    %c0_i32_0 = arith.constant 0 : i32
    %c0_i32_1 = arith.constant 0 : i32
    return %c0_i32, %c0_i32_0 : i32, i32
  }
  func.func @transform_5(%arg0: i32) -> (i32, i32) {
    %c0_i32 = arith.constant 0 : i32
    %c0_i32_0 = arith.constant 0 : i32
    %c0_i32_1 = arith.constant 0 : i32
    return %c0_i32, %c0_i32_0 : i32, i32
  }
  func.func @transform_6(%arg0: i32) -> (i32, i32) {
    %c0_i32 = arith.constant 0 : i32
    %c0_i32_0 = arith.constant 0 : i32
    %c0_i32_1 = arith.constant 0 : i32
    return %c0_i32, %c0_i32_0 : i32, i32
  }
  func.func @transform_7(%arg0: i32) -> (i32, i32) {
    %c0_i32 = arith.constant 0 : i32
    %c0_i32_0 = arith.constant 0 : i32
    %c0_i32_1 = arith.constant 0 : i32
    return %c0_i32, %c0_i32_0 : i32, i32
  }
  func.func @transform_8(%arg0: i32) -> (i32, i32) {
    %c0_i32 = arith.constant 0 : i32
    %c0_i32_0 = arith.constant 0 : i32
    %c0_i32_1 = arith.constant 0 : i32
    return %c0_i32, %c0_i32_0 : i32, i32
  }
  func.func @transform_9(%arg0: i32) -> (i32, i32) {
    %c0_i32 = arith.constant 0 : i32
    %c0_i32_0 = arith.constant 0 : i32
    %c0_i32_1 = arith.constant 0 : i32
    return %c0_i32, %c0_i32_0 : i32, i32
  }
  func.func @transform_10(%arg0: i32) -> (i32, i32) {
    %c0_i32 = arith.constant 0 : i32
    %c0_i32_0 = arith.constant 0 : i32
    %c0_i32_1 = arith.constant 0 : i32
    return %c0_i32, %c0_i32_0 : i32, i32
  }
  func.func @transform_11(%arg0: i32) -> (i32, i32) {
    %c0_i32 = arith.constant 0 : i32
    %c0_i32_0 = arith.constant 0 : i32
    return %arg0, %c0_i32 : i32, i32
  }
  func.func @transform_12(%arg0: i32) -> (i32, i32) {
    %c0_i32 = arith.constant 0 : i32
    %c0_i32_0 = arith.constant 0 : i32
    return %arg0, %c0_i32 : i32, i32
  }
}

</mosaic_0001>

<llo_original>
// kernel: tpu_custom_call.1
$region0: #{tpu_custom_call.1}
  #allocation0 [shape = 'u32[]', space=smem, size = 0x4, offset = 0x4, fixed_abs, tag = 'smem constant byte address 0x4 - core index']
  #allocation1 [shape = 'u32[144,128]{1,0:T(1,128)}', space=vmem, size = 0x12000, scoped, tag = 'internal scratch']
  %s0 = inlined_call_operand.hbm [shape: bf16[2,32], index: 0, kind: input, shape index: {}]
  %s1 = inlined_call_operand.hbm [shape: bf16[16,32], index: 1, kind: input, shape index: {}]
  %s2 = inlined_call_operand.hbm [shape: bf16[16,32], index: 2, kind: input, shape index: {}]
  %s3 = inlined_call_operand.vmem [shape: f32[16,1], index: 3, kind: input, shape index: {}]
  %s4 = inlined_call_operand.vmem [shape: bf16[32,32], index: 4, kind: input, shape index: {}]
  %s5 = inlined_call_operand.vmem [shape: bf16[32,32], index: 5, kind: input, shape index: {}]
  %s6 = inlined_call_operand.hbm [shape: bf16[32,32], index: 6, kind: input, shape index: {}]
  %s7 = inlined_call_operand.hbm [shape: bf16[32,32], index: 7, kind: input, shape index: {}]
  %s8 = inlined_call_operand.hbm [shape: bf16[32,32], index: 8, kind: input, shape index: {}]
  %s9 = inlined_call_operand.vmem [shape: bf16[32,32], index: 9, kind: input, shape index: {}]
  %s10 = inlined_call_operand.hbm [shape: f32[8,32], index: 10, kind: input, shape index: {}]
  %s11 = inlined_call_operand.hbm [shape: f32[2,32], index: 11, kind: output, shape index: {0}]
  %s12 = inlined_call_operand.vmem [shape: f32[16,4], index: 12, kind: output, shape index: {1}]
  %13 = xla_tuple %s11, %s12
  %s14 = sld [smem:[#allocation0]]
  $region90: #{tpu_custom_call.1} parent=0
    _
  %s16 = ssub.s32 1, %s14
  %s17 = scalar_select 0, %s16, %s14
  $region1: #{tpu_custom_call.1} parent=0
    #allocation2 [shape = 'u8[512]{0}', space=vmem, size = 0x400, scoped, tag = 'input window, operand 0, single buffered']
    #allocation3 [shape = 's32[1]{0}', space=sflag, size = 0x4, scoped, tag = 'scoped memory for tpu_custom_call.1']
    #allocation4 [shape = 's32[1]{0}', space=sflag, size = 0x4, scoped, tag = 'scoped memory for tpu_custom_call.1']
    #allocation5 [shape = 'u8[4096]{0}', space=vmem, size = 0x1000, scoped, tag = 'input window, operand 1, single buffered']
    #allocation6 [shape = 's32[1]{0}', space=sflag, size = 0x4, scoped, tag = 'scoped memory for tpu_custom_call.1']
    #allocation7 [shape = 'u8[4096]{0}', space=vmem, size = 0x1000, scoped, tag = 'input window, operand 2, single buffered']
    #allocation8 [shape = 'u8[8192]{0}', space=vmem, size = 0x2000, scoped, tag = 'input window, operand 6, single buffered']
    #allocation9 [shape = 's32[1]{0}', space=sflag, size = 0x4, scoped, tag = 'scoped memory for tpu_custom_call.1']
    #allocation10 [shape = 'u8[8192]{0}', space=vmem, size = 0x2000, scoped, tag = 'input window, operand 7, single buffered']
    #allocation11 [shape = 'u8[8192]{0}', space=vmem, size = 0x2000, scoped, tag = 'input window, operand 8, single buffered']
    #allocation12 [shape = 's32[1]{0}', space=sflag, size = 0x4, scoped, tag = 'scoped memory for tpu_custom_call.1']
    #allocation13 [shape = 'u8[4096]{0}', space=vmem, size = 0x1000, scoped, tag = 'input window, operand 10, single buffered']
    #allocation14 [shape = 'u8[1024]{0}', space=vmem, size = 0x400, scoped, tag = 'output window, operand 0, single buffered']
    %18 = vsyncpa [#allocation3], 0
    %19 = vsyncpa [#allocation6], 0
    %20 = vsyncpa [#allocation9], 0
    %21 = vsyncpa [#allocation12], 0
    %22 = vsyncpa [#allocation4], 0
    // Predicated region
    $region2: #{tpu_custom_call.1} parent=1 // pred_check
      _
    $region3: #{tpu_custom_call.1} parent=1 // pred_check_branch
      %24 = sbr.rel (0) target = $region5
    $region4: #{tpu_custom_call.1} parent=1 // pred_region
      %s26 = ssub.s32 16, 16
      %27 = vsyncadd [#allocation3], %s26
      %s29 = sshll.u32 [#allocation2], 4
      %s30 = int_to_ptr.vmem [resolvable:$true] %s29
      %32 = dma.hbm_to_vmem [thread:$0]  %s0, 16, %s30, [#allocation3]
    $region5: #{tpu_custom_call.1} parent=1 // pred_fallthru
      _
    // Predicated region
    $region6: #{tpu_custom_call.1} parent=1 // pred_check
      _
    $region7: #{tpu_custom_call.1} parent=1 // pred_check_branch
      %34 = sbr.rel (0) target = $region9
    $region8: #{tpu_custom_call.1} parent=1 // pred_region
      %s36 = ssub.s32 128, 128
      %37 = vsyncadd [#allocation6], %s36
      %s38 = sshll.u32 [#allocation5], 4
      %s39 = int_to_ptr.vmem [resolvable:$true] %s38
      %44 = dma.hbm_to_vmem [thread:$0]  %s1, 128, %s39, [#allocation6], 64, 64, 4
    $region9: #{tpu_custom_call.1} parent=1 // pred_fallthru
      _
    // Predicated region
    $region10: #{tpu_custom_call.1} parent=1 // pred_check
      _
    $region11: #{tpu_custom_call.1} parent=1 // pred_check_branch
      %46 = sbr.rel (0) target = $region13
    $region12: #{tpu_custom_call.1} parent=1 // pred_region
      %s48 = ssub.s32 128, 128
      %49 = vsyncadd [#allocation6], %s48
      %s50 = sshll.u32 [#allocation7], 4
      %s51 = int_to_ptr.vmem [resolvable:$true] %s50
      %56 = dma.hbm_to_vmem [thread:$0]  %s2, 128, %s51, [#allocation6], 64, 64, 4
    $region13: #{tpu_custom_call.1} parent=1 // pred_fallthru
      _
    // Predicated region
    $region14: #{tpu_custom_call.1} parent=1 // pred_check
      _
    $region15: #{tpu_custom_call.1} parent=1 // pred_check_branch
      %58 = sbr.rel (0) target = $region17
    $region16: #{tpu_custom_call.1} parent=1 // pred_region
      _
    $region17: #{tpu_custom_call.1} parent=1 // pred_fallthru
      _
    // Predicated region
    $region18: #{tpu_custom_call.1} parent=1 // pred_check
      _
    $region19: #{tpu_custom_call.1} parent=1 // pred_check_branch
      %60 = sbr.rel (0) target = $region21
    $region20: #{tpu_custom_call.1} parent=1 // pred_region
      _
    $region21: #{tpu_custom_call.1} parent=1 // pred_fallthru
      _
    // Predicated region
    $region22: #{tpu_custom_call.1} parent=1 // pred_check
      _
    $region23: #{tpu_custom_call.1} parent=1 // pred_check_branch
      %62 = sbr.rel (0) target = $region25
    $region24: #{tpu_custom_call.1} parent=1 // pred_region
      _
    $region25: #{tpu_custom_call.1} parent=1 // pred_fallthru
      _
    // Predicated region
    $region26: #{tpu_custom_call.1} parent=1 // pred_check
      _
    $region27: #{tpu_custom_call.1} parent=1 // pred_check_branch
      %64 = sbr.rel (0) target = $region29
    $region28: #{tpu_custom_call.1} parent=1 // pred_region
      %s66 = ssub.s32 256, 256
      %67 = vsyncadd [#allocation9], %s66
      %s68 = sshll.u32 [#allocation8], 4
      %s69 = int_to_ptr.vmem [resolvable:$true] %s68
      %74 = dma.hbm_to_vmem [thread:$0]  %s6, 256, %s69, [#allocation9], 64, 64, 4
    $region29: #{tpu_custom_call.1} parent=1 // pred_fallthru
      _
    // Predicated region
    $region30: #{tpu_custom_call.1} parent=1 // pred_check
      _
    $region31: #{tpu_custom_call.1} parent=1 // pred_check_branch
      %76 = sbr.rel (0) target = $region33
    $region32: #{tpu_custom_call.1} parent=1 // pred_region
      %s78 = ssub.s32 256, 256
      %79 = vsyncadd [#allocation9], %s78
      %s80 = sshll.u32 [#allocation10], 4
      %s81 = int_to_ptr.vmem [resolvable:$true] %s80
      %86 = dma.hbm_to_vmem [thread:$0]  %s7, 256, %s81, [#allocation9], 64, 64, 4
    $region33: #{tpu_custom_call.1} parent=1 // pred_fallthru
      _
    // Predicated region
    $region34: #{tpu_custom_call.1} parent=1 // pred_check
      _
    $region35: #{tpu_custom_call.1} parent=1 // pred_check_branch
      %88 = sbr.rel (0) target = $region37
    $region36: #{tpu_custom_call.1} parent=1 // pred_region
      %s90 = ssub.s32 256, 256
      %91 = vsyncadd [#allocation12], %s90
      %s92 = sshll.u32 [#allocation11], 4
      %s93 = int_to_ptr.vmem [resolvable:$true] %s92
      %98 = dma.hbm_to_vmem [thread:$0]  %s8, 256, %s93, [#allocation12], 64, 64, 4
    $region37: #{tpu_custom_call.1} parent=1 // pred_fallthru
      _
    // Predicated region
    $region38: #{tpu_custom_call.1} parent=1 // pred_check
      _
    $region39: #{tpu_custom_call.1} parent=1 // pred_check_branch
      %100 = sbr.rel (0) target = $region41
    $region40: #{tpu_custom_call.1} parent=1 // pred_region
      _
    $region41: #{tpu_custom_call.1} parent=1 // pred_fallthru
      _
    // Predicated region
    $region42: #{tpu_custom_call.1} parent=1 // pred_check
      _
    $region43: #{tpu_custom_call.1} parent=1 // pred_check_branch
      %102 = sbr.rel (0) target = $region45
    $region44: #{tpu_custom_call.1} parent=1 // pred_region
      %s104 = ssub.s32 128, 128
      %105 = vsyncadd [#allocation12], %s104
      %s107 = sshll.u32 [#allocation13], 4
      %s108 = int_to_ptr.vmem [resolvable:$true] %s107
      %110 = dma.hbm_to_vmem [thread:$0]  %s10, 128, %s108, [#allocation12]
    $region45: #{tpu_custom_call.1} parent=1 // pred_fallthru
      _
    // Predicated region
    $region46: #{tpu_custom_call.1} parent=1 // pred_check
      _
    $region47: #{tpu_custom_call.1} parent=1 // pred_check_branch
      %112 = sbr.rel (0) target = $region49
    $region48: #{tpu_custom_call.1} parent=1 // pred_region
      %113 = dma.done [#allocation3], 16
    $region49: #{tpu_custom_call.1} parent=1 // pred_fallthru
      _
    // Predicated region
    $region50: #{tpu_custom_call.1} parent=1 // pred_check
      _
    $region51: #{tpu_custom_call.1} parent=1 // pred_check_branch
      %115 = sbr.rel (0) target = $region53
    $region52: #{tpu_custom_call.1} parent=1 // pred_region
      %116 = dma.done [#allocation6], 128
    $region53: #{tpu_custom_call.1} parent=1 // pred_fallthru
      _
    // Predicated region
    $region54: #{tpu_custom_call.1} parent=1 // pred_check
      _
    $region55: #{tpu_custom_call.1} parent=1 // pred_check_branch
      %118 = sbr.rel (0) target = $region57
    $region56: #{tpu_custom_call.1} parent=1 // pred_region
      %119 = dma.done [#allocation6], 128
    $region57: #{tpu_custom_call.1} parent=1 // pred_fallthru
      _
    // Predicated region
    $region58: #{tpu_custom_call.1} parent=1 // pred_check
      _
    $region59: #{tpu_custom_call.1} parent=1 // pred_check_branch
      %121 = sbr.rel (0) target = $region61
    $region60: #{tpu_custom_call.1} parent=1 // pred_region
      %122 = dma.done [#allocation9], 256
    $region61: #{tpu_custom_call.1} parent=1 // pred_fallthru
      _
    // Predicated region
    $region62: #{tpu_custom_call.1} parent=1 // pred_check
      _
    $region63: #{tpu_custom_call.1} parent=1 // pred_check_branch
      %124 = sbr.rel (0) target = $region65
    $region64: #{tpu_custom_call.1} parent=1 // pred_region
      %125 = dma.done [#allocation9], 256
    $region65: #{tpu_custom_call.1} parent=1 // pred_fallthru
      _
    // Predicated region
    $region66: #{tpu_custom_call.1} parent=1 // pred_check
      _
    $region67: #{tpu_custom_call.1} parent=1 // pred_check_branch
      %127 = sbr.rel (0) target = $region69
    $region68: #{tpu_custom_call.1} parent=1 // pred_region
      %128 = dma.done [#allocation12], 256
    $region69: #{tpu_custom_call.1} parent=1 // pred_fallthru
      _
    // Predicated region
    $region70: #{tpu_custom_call.1} parent=1 // pred_check
      _
    $region71: #{tpu_custom_call.1} parent=1 // pred_check_branch
      %130 = sbr.rel (0) target = $region73
    $region72: #{tpu_custom_call.1} parent=1 // pred_region
      %131 = dma.done [#allocation12], 128
    $region73: #{tpu_custom_call.1} parent=1 // pred_fallthru
      _
    %v133 = vld [vmem:[#allocation2] sm:$0x1]
    %v134 = vld [vmem:[%s4] sm:$0xf]
    %v135 = vld [vmem:[%s4 + $0x4] sm:$0xf]
    %v136 = vld [vmem:[%s4 + $0x8] sm:$0xf]
    %v137 = vld [vmem:[%s4 + $0xc] sm:$0xf]
    %v142 = vunpack.c.l.b16 %v134
    %v143 = vunpack.c.l.b16 %v135
    %v144 = vunpack.c.l.b16 %v136
    %v145 = vunpack.c.l.b16 %v137
    %v146 = vpack.c.b16 %v143, %v142
    %v147 = vpack.c.b16 %v145, %v144
    %vm150 = vcmask 261120
    %v152 = vsel %vm150, %v133, 0
    %154 = vmatprep.subr.bf16.mxu0 0
    %155 = vmatpush1.bf16.msra.mxu0 %v146
    %156 = vmatprep.subr.bf16.mxu0 0
    %157 = vmatpush1.bf16.msra.mxu0 %v147
    %158 = vmatprep.subr.bf16.mxu0 0
    %159 = vmatpush1.bf16.msra.mxu0 0
    %160 = vmatprep.subr.bf16.mxu0 0
    %161 = vmatpush1.bf16.msra.mxu0 0
    %162 = vmatprep.subr.bf16.mxu0 0
    %163 = vmatpush1.bf16.msra.mxu0 0
    %164 = vmatprep.subr.bf16.mxu0 0
    %165 = vmatpush1.bf16.msra.mxu0 0
    %166 = vmatprep.subr.bf16.mxu0 0
    %167 = vmatpush1.bf16.msra.mxu0 0
    %168 = vmatprep.subr.bf16.mxu0 0
    %169 = vmatpush1.bf16.msra.mxu0 0
    %170 = vmatprep.subr.bf16.mxu0 0
    %171 = vmatpush1.bf16.msra.mxu0 0
    %172 = vmatprep.subr.bf16.mxu0 0
    %173 = vmatpush1.bf16.msra.mxu0 0
    %174 = vmatprep.subr.bf16.mxu0 0
    %175 = vmatpush1.bf16.msra.mxu0 0
    %176 = vmatprep.subr.bf16.mxu0 0
    %177 = vmatpush1.bf16.msra.mxu0 0
    %178 = vmatprep.subr.bf16.mxu0 0
    %179 = vmatpush1.bf16.msra.mxu0 0
    %180 = vmatprep.subr.bf16.mxu0 0
    %181 = vmatpush1.bf16.msra.mxu0 0
    %182 = vmatprep.subr.bf16.mxu0 0
    %183 = vmatpush1.bf16.msra.mxu0 0
    %184 = vmatprep.subr.bf16.mxu0 0
    %185 = vmatpush1.bf16.msra.mxu0 0
    %186 = vmatprep.mubr.bf16.mxu0 0
    %187 = vmatmul.mubr.bf16.gmra.mrb[0].mxu0 %v152
    %v188 = vpop.f32.mrb[0].mxu0
    %v189 = vadd.f32 0.0, %v188
    %v190 = vpop.f32.mrb[0].mxu0
    %v191 = vpop.f32.mrb[0].mxu0
    %v192 = vpop.f32.mrb[0].mxu0
    %193 = vdwg.mxu0
    %v194 = vmul.f32 %v189, 0.35355338
    %v195 = vld [vmem:[#allocation5] sm:$0xf]
    %v196 = vld [vmem:[#allocation5 + $0x4] sm:$0xf]
    %v197 = vld [vmem:[%s5] sm:$0xf]
    %v198 = vld [vmem:[%s5 + $0x4] sm:$0xf]
    %v199 = vld [vmem:[%s5 + $0x8] sm:$0xf]
    %v200 = vld [vmem:[%s5 + $0xc] sm:$0xf]
    %v203 = vunpack.c.l.b16 %v195
    %v204 = vunpack.c.l.b16 %v196
    %v205 = vpack.c.b16 %v204, %v203
    %v210 = vunpack.c.l.b16 %v197
    %v211 = vunpack.c.l.b16 %v198
    %v212 = vunpack.c.l.b16 %v199
    %v213 = vunpack.c.l.b16 %v200
    %v214 = vpack.c.b16 %v211, %v210
    %v215 = vpack.c.b16 %v213, %v212
    %v219 = vsel %vm150, %v205, 0
    %221 = vmatprep.subr.bf16.mxu0 0
    %222 = vmatpush1.bf16.msra.mxu0 %v214
    %223 = vmatprep.subr.bf16.mxu0 0
    %224 = vmatpush1.bf16.msra.mxu0 %v215
    %225 = vmatprep.subr.bf16.mxu0 0
    %226 = vmatpush1.bf16.msra.mxu0 0
    %227 = vmatprep.subr.bf16.mxu0 0
    %228 = vmatpush1.bf16.msra.mxu0 0
    %229 = vmatprep.subr.bf16.mxu0 0
    %230 = vmatpush1.bf16.msra.mxu0 0
    %231 = vmatprep.subr.bf16.mxu0 0
    %232 = vmatpush1.bf16.msra.mxu0 0
    %233 = vmatprep.subr.bf16.mxu0 0
    %234 = vmatpush1.bf16.msra.mxu0 0
    %235 = vmatprep.subr.bf16.mxu0 0
    %236 = vmatpush1.bf16.msra.mxu0 0
    %237 = vmatprep.subr.bf16.mxu0 0
    %238 = vmatpush1.bf16.msra.mxu0 0
    %239 = vmatprep.subr.bf16.mxu0 0
    %240 = vmatpush1.bf16.msra.mxu0 0
    %241 = vmatprep.subr.bf16.mxu0 0
    %242 = vmatpush1.bf16.msra.mxu0 0
    %243 = vmatprep.subr.bf16.mxu0 0
    %244 = vmatpush1.bf16.msra.mxu0 0
    %245 = vmatprep.subr.bf16.mxu0 0
    %246 = vmatpush1.bf16.msra.mxu0 0
    %247 = vmatprep.subr.bf16.mxu0 0
    %248 = vmatpush1.bf16.msra.mxu0 0
    %249 = vmatprep.subr.bf16.mxu0 0
    %250 = vmatpush1.bf16.msra.mxu0 0
    %251 = vmatprep.subr.bf16.mxu0 0
    %252 = vmatpush1.bf16.msra.mxu0 0
    %253 = vmatprep.mubr.bf16.mxu0 0
    %254 = vmatmul.mubr.bf16.gmra.mrb[0].mxu0 %v219
    %v255 = vpop.f32.mrb[0].mxu0
    %v256 = vadd.f32 0.0, %v255
    %v257 = vpop.f32.mrb[0].mxu0
    %v258 = vpop.f32.mrb[0].mxu0
    %v259 = vadd.f32 0.0, %v258
    %v260 = vpop.f32.mrb[0].mxu0
    %261 = vdwg.mxu0
    %v262 = vld [vmem:[#allocation7] sm:$0xf]
    %v263 = vld [vmem:[#allocation7 + $0x4] sm:$0xf]
    %v264 = vld [vmem:[#allocation8] sm:$0xf]
    %v265 = vld [vmem:[#allocation8 + $0x4] sm:$0xf]
    %v266 = vld [vmem:[#allocation8 + $0x8] sm:$0xf]
    %v267 = vld [vmem:[#allocation8 + $0xc] sm:$0xf]
    %v270 = vunpack.c.l.b16 %v262
    %v271 = vunpack.c.l.b16 %v263
    %v272 = vpack.c.b16 %v271, %v270
    %v277 = vunpack.c.l.b16 %v264
    %v278 = vunpack.c.l.b16 %v265
    %v279 = vunpack.c.l.b16 %v266
    %v280 = vunpack.c.l.b16 %v267
    %v281 = vpack.c.b16 %v278, %v277
    %v282 = vpack.c.b16 %v280, %v279
    %v286 = vsel %vm150, %v272, 0
    %288 = vmatprep.subr.bf16.mxu0 0
    %289 = vmatpush1.bf16.msra.mxu0 %v281
    %290 = vmatprep.subr.bf16.mxu0 0
    %291 = vmatpush1.bf16.msra.mxu0 %v282
    %292 = vmatprep.subr.bf16.mxu0 0
    %293 = vmatpush1.bf16.msra.mxu0 0
    %294 = vmatprep.subr.bf16.mxu0 0
    %295 = vmatpush1.bf16.msra.mxu0 0
    %296 = vmatprep.subr.bf16.mxu0 0
    %297 = vmatpush1.bf16.msra.mxu0 0
    %298 = vmatprep.subr.bf16.mxu0 0
    %299 = vmatpush1.bf16.msra.mxu0 0
    %300 = vmatprep.subr.bf16.mxu0 0
    %301 = vmatpush1.bf16.msra.mxu0 0
    %302 = vmatprep.subr.bf16.mxu0 0
    %303 = vmatpush1.bf16.msra.mxu0 0
    %304 = vmatprep.subr.bf16.mxu0 0
    %305 = vmatpush1.bf16.msra.mxu0 0
    %306 = vmatprep.subr.bf16.mxu0 0
    %307 = vmatpush1.bf16.msra.mxu0 0
    %308 = vmatprep.subr.bf16.mxu0 0
    %309 = vmatpush1.bf16.msra.mxu0 0
    %310 = vmatprep.subr.bf16.mxu0 0
    %311 = vmatpush1.bf16.msra.mxu0 0
    %312 = vmatprep.subr.bf16.mxu0 0
    %313 = vmatpush1.bf16.msra.mxu0 0
    %314 = vmatprep.subr.bf16.mxu0 0
    %315 = vmatpush1.bf16.msra.mxu0 0
    %316 = vmatprep.subr.bf16.mxu0 0
    %317 = vmatpush1.bf16.msra.mxu0 0
    %318 = vmatprep.subr.bf16.mxu0 0
    %319 = vmatpush1.bf16.msra.mxu0 0
    %320 = vmatprep.mubr.bf16.mxu0 0
    %321 = vmatmul.mubr.bf16.gmra.mrb[0].mxu0 %v286
    %v322 = vpop.f32.mrb[0].mxu0
    %v323 = vadd.f32 0.0, %v322
    %v324 = vpop.f32.mrb[0].mxu0
    %v325 = vpop.f32.mrb[0].mxu0
    %v326 = vadd.f32 0.0, %v325
    %v327 = vpop.f32.mrb[0].mxu0
    %328 = vdwg.mxu0
    %v329 = vlaneseq
    %v330 = vshrl.u32 %v329, 7
    %v331 = vadd.s32 %v330, 8
    %v332 = vadd.s32 %v330, 16
    %v333 = vadd.s32 %v330, 24
    %v334 = vlaneseq
    %v335 = vand.u32 %v334, 127
    %v336 = vmul.u32 %v335, 8
    %vm337 = vcmp.ge.s32.totalorder %v330, %v336
    %vm338 = vcmp.ge.s32.totalorder %v331, %v336
    %vm339 = vcmp.ge.s32.totalorder %v332, %v336
    %vm340 = vcmp.ge.s32.totalorder %v333, %v336
    %v341 = vadd.s32 %v335, 1
    %v342 = vmul.u32 %v341, 8
    %vm343 = vcmp.lt.s32.totalorder %v330, %v342
    %vm344 = vcmp.lt.s32.totalorder %v331, %v342
    %vm345 = vcmp.lt.s32.totalorder %v332, %v342
    %vm346 = vcmp.lt.s32.totalorder %v333, %v342
    %vm347 = vmand %vm337, %vm343
    %vm348 = vmand %vm338, %vm344
    %vm349 = vmand %vm339, %vm345
    %vm350 = vmand %vm340, %vm346
    %v351 = vsel %vm347, 1, 0
    %v352 = vsel %vm348, 1, 0
    %v353 = vsel %vm349, 1, 0
    %v354 = vsel %vm350, 1, 0
    %v355 = vcvt.s32.f32 %v351
    %v356 = vcvt.s32.f32 %v352
    %v357 = vcvt.s32.f32 %v353
    %v358 = vcvt.s32.f32 %v354
    %v359 = vmul.u32 %v330, 8
    %vm360 = vcmp.ge.s32.totalorder %v335, %v359
    %v361 = vadd.s32 %v330, 1
    %v362 = vmul.u32 %v361, 8
    %vm363 = vcmp.lt.s32.totalorder %v335, %v362
    %vm364 = vmand %vm360, %vm363
    %v365 = vsel %vm364, 1, 0
    %v366 = vcvt.s32.f32 %v365
    %v369 = vunpack.c.l.s4 1966171168
    %v370 = vunpack.c.0.s8 %v369
    %v371 = vlaneseq
    %v372 = vshrl.u32 %v371, 7
    %v373 = vsub.s32 %v370, %v372
    %v374 = vrot.slane %v194, %v373
    %v375 = vcombine.high %v374, %v374
    %v377 = vunpack.c.l.s4 1966171168
    %v378 = vunpack.c.0.s8 %v377
    %v379 = vlaneseq
    %v380 = vshrl.u32 %v379, 7
    %v381 = vsub.s32 %v378, %v380
    %v382 = vrot.slane %v374, %v381
    %v384 = vunpack.c.l.s4 1966171168
    %v385 = vunpack.c.0.s8 %v384
    %v386 = vlaneseq
    %v387 = vshrl.u32 %v386, 7
    %v388 = vsub.s32 %v385, %v387
    %v389 = vrot.slane %v375, %v388
    %v390 = vlaneseq
    %v391 = vshrl.u32 %v390, 7
    %v392 = vsub.s32 0, %v391
    %v393 = vrot.slane %v382, %v392
    %v394 = vlaneseq
    %v395 = vshrl.u32 %v394, 7
    %v396 = vsub.s32 0, %v395
    %v397 = vrot.slane %v389, %v396
    %v400 = vmul.f32 %v393, %v256
    %v401 = vmul.f32 %v397, %v259
    %v403 = vsel %vm150, %v400, 0
    %v406 = vsel %vm150, %v401, 0
    %408 = vmatprep.subr.mxu0 0.0
    %409 = vmatpush1.msra.mxu0 %v355
    %410 = vmatprep.subr.mxu0 0.0
    %411 = vmatpush1.msra.mxu0 %v356
    %412 = vmatprep.subr.mxu0 0.0
    %413 = vmatpush1.msra.mxu0 %v357
    %414 = vmatprep.subr.mxu0 0.0
    %415 = vmatpush1.msra.mxu0 %v358
    %416 = vmatprep.subr.mxu0 0.0
    %417 = vmatpush1.msra.mxu0 0.0
    %418 = vmatprep.subr.mxu0 0.0
    %419 = vmatpush1.msra.mxu0 0.0
    %420 = vmatprep.subr.mxu0 0.0
    %421 = vmatpush1.msra.mxu0 0.0
    %422 = vmatprep.subr.mxu0 0.0
    %423 = vmatpush1.msra.mxu0 0.0
    %424 = vmatprep.subr.mxu0 0.0
    %425 = vmatpush1.msra.mxu0 0.0
    %426 = vmatprep.subr.mxu0 0.0
    %427 = vmatpush1.msra.mxu0 0.0
    %428 = vmatprep.subr.mxu0 0.0
    %429 = vmatpush1.msra.mxu0 0.0
    %430 = vmatprep.subr.mxu0 0.0
    %431 = vmatpush1.msra.mxu0 0.0
    %432 = vmatprep.subr.mxu0 0.0
    %433 = vmatpush1.msra.mxu0 0.0
    %434 = vmatprep.subr.mxu0 0.0
    %435 = vmatpush1.msra.mxu0 0.0
    %436 = vmatprep.subr.mxu0 0.0
    %437 = vmatpush1.msra.mxu0 0.0
    %438 = vmatprep.subr.mxu0 0.0
    %439 = vmatpush1.msra.mxu0 0.0
    %440 = vmatprep.subr.mxu0 0.0
    %441 = vmatpush1.msra.mxu0 0.0
    %442 = vmatprep.subr.mxu0 0.0
    %443 = vmatpush1.msra.mxu0 0.0
    %444 = vmatprep.subr.mxu0 0.0
    %445 = vmatpush1.msra.mxu0 0.0
    %446 = vmatprep.subr.mxu0 0.0
    %447 = vmatpush1.msra.mxu0 0.0
    %448 = vmatprep.subr.mxu0 0.0
    %449 = vmatpush1.msra.mxu0 0.0
    %450 = vmatprep.subr.mxu0 0.0
    %451 = vmatpush1.msra.mxu0 0.0
    %452 = vmatprep.subr.mxu0 0.0
    %453 = vmatpush1.msra.mxu0 0.0
    %454 = vmatprep.subr.mxu0 0.0
    %455 = vmatpush1.msra.mxu0 0.0
    %456 = vmatprep.subr.mxu0 0.0
    %457 = vmatpush1.msra.mxu0 0.0
    %458 = vmatprep.subr.mxu0 0.0
    %459 = vmatpush1.msra.mxu0 0.0
    %460 = vmatprep.subr.mxu0 0.0
    %461 = vmatpush1.msra.mxu0 0.0
    %462 = vmatprep.subr.mxu0 0.0
    %463 = vmatpush1.msra.mxu0 0.0
    %464 = vmatprep.subr.mxu0 0.0
    %465 = vmatpush1.msra.mxu0 0.0
    %466 = vmatprep.subr.mxu0 0.0
    %467 = vmatpush1.msra.mxu0 0.0
    %468 = vmatprep.subr.mxu0 0.0
    %469 = vmatpush1.msra.mxu0 0.0
    %470 = vmatprep.subr.mxu0 0.0
    %471 = vmatpush1.msra.mxu0 0.0
    %472 = vmatprep.mubr.f32.mxu0 0.0
    %473 = vmatmul.mubr.f32.gmra.mrb[0].mxu0 %v403
    %v474 = vpop.f32.mrb[0].mxu0
    %v475 = vadd.f32 0.0, %v474
    %v476 = vpop.f32.mrb[0].mxu0
    %477 = vmatprep.mubr.f32.mxu0 0.0
    %478 = vmatmul.mubr.f32.gmra.mrb[0].mxu0 %v406
    %v479 = vpop.f32.mrb[0].mxu0
    %v480 = vadd.f32 0.0, %v479
    %v481 = vpop.f32.mrb[0].mxu0
    %482 = vdwg.mxu0
    %v483 = vld [vmem:[%s3] sm:$0xff]
    %v484 = vld [vmem:[%s3 + $0x8] sm:$0xff]
    %vm485 = vcmp.gt.f32.partialorder %v483, 0.0
    %vm486 = vcmp.gt.f32.partialorder %v484, 0.0
    %v487 = vsel %vm485, 1, 0
    %v488 = vsel %vm486, 1, 0
    %489 = vset.pattern.permute.xlu0 0
    %490 = vperm.xlu0 %489, %v487
    %v491 = vpop.permute.xlu0 %490
    %492 = vset.pattern.permute.xlu0 0
    %493 = vperm.xlu0 %492, %v488
    %v494 = vpop.permute.xlu0 %493
    %vm495 = vcmp.eq.s32.totalorder %v491, 1
    %vm496 = vcmp.eq.s32.totalorder %v494, 1
    %v497 = vsel %vm495, %v475, -1e+09
    %v498 = vsel %vm496, %v480, -1e+09
    %vm499 = vcmask 31744
    %v500 = vsel %vm499, %v497, -inf
    %v501 = vrot.slane %v500, 4
    %v502 = vmax.f32 %v500, %v501
    %v503 = vrot.slane %v502, 2
    %v504 = vmax.f32 %v502, %v503
    %v505 = vrot.slane %v504, 1
    %v506 = vmax.f32 %v504, %v505
    %v507 = vsel %vm499, %v498, -inf
    %v508 = vrot.slane %v507, 4
    %v509 = vmax.f32 %v507, %v508
    %v510 = vrot.slane %v509, 2
    %v511 = vmax.f32 %v509, %v510
    %v512 = vrot.slane %v511, 1
    %v513 = vmax.f32 %v511, %v512
    %v514 = vsub.f32 %v497, %v506
    %v515 = vsub.f32 %v498, %v513
    %v516 = vmul.f32 %v514, 1.442695
    %v517 = vpow.pop %v516
    %v518 = vmul.f32 %v515, 1.442695
    %v519 = vpow.pop %v518
    %v520 = vsel %vm499, %v517, 0.0
    %v521 = vrot.slane %v520, 4
    %v522 = vadd.f32 %v520, %v521
    %v523 = vrot.slane %v522, 2
    %v524 = vadd.f32 %v522, %v523
    %v525 = vrot.slane %v524, 1
    %v526 = vadd.f32 %v524, %v525
    %v527 = vsel %vm499, %v519, 0.0
    %v528 = vrot.slane %v527, 4
    %v529 = vadd.f32 %v527, %v528
    %v530 = vrot.slane %v529, 2
    %v531 = vadd.f32 %v529, %v530
    %v532 = vrot.slane %v531, 1
    %v533 = vadd.f32 %v531, %v532
    %v534 = vrcp.pop %v526
    %v535 = vmul.f32 %v517, %v534
    %v536 = vrcp.pop %v533
    %v537 = vmul.f32 %v519, %v536
    %538 = vst.msk [vmem:[%s12] sm:$0xff] %vm499, %v535
    %539 = vst.msk [vmem:[%s12 + $0x8] sm:$0xff] %vm499, %v537
    %v541 = vsel %vm499, %v535, 0
    %v544 = vsel %vm499, %v537, 0
    %vm546 = vcmask 1043456
    %v548 = vsel %vm546, %v366, 0
    %550 = vmatprep.subr.mxu0 0.0
    %551 = vmatpush1.msra.mxu0 %v548
    %552 = vmatprep.subr.mxu0 0.0
    %553 = vmatpush1.msra.mxu0 0.0
    %554 = vmatprep.subr.mxu0 0.0
    %555 = vmatpush1.msra.mxu0 0.0
    %556 = vmatprep.subr.mxu0 0.0
    %557 = vmatpush1.msra.mxu0 0.0
    %558 = vmatprep.subr.mxu0 0.0
    %559 = vmatpush1.msra.mxu0 0.0
    %560 = vmatprep.subr.mxu0 0.0
    %561 = vmatpush1.msra.mxu0 0.0
    %562 = vmatprep.subr.mxu0 0.0
    %563 = vmatpush1.msra.mxu0 0.0
    %564 = vmatprep.subr.mxu0 0.0
    %565 = vmatpush1.msra.mxu0 0.0
    %566 = vmatprep.subr.mxu0 0.0
    %567 = vmatpush1.msra.mxu0 0.0
    %568 = vmatprep.subr.mxu0 0.0
    %569 = vmatpush1.msra.mxu0 0.0
    %570 = vmatprep.subr.mxu0 0.0
    %571 = vmatpush1.msra.mxu0 0.0
    %572 = vmatprep.subr.mxu0 0.0
    %573 = vmatpush1.msra.mxu0 0.0
    %574 = vmatprep.subr.mxu0 0.0
    %575 = vmatpush1.msra.mxu0 0.0
    %576 = vmatprep.subr.mxu0 0.0
    %577 = vmatpush1.msra.mxu0 0.0
    %578 = vmatprep.subr.mxu0 0.0
    %579 = vmatpush1.msra.mxu0 0.0
    %580 = vmatprep.subr.mxu0 0.0
    %581 = vmatpush1.msra.mxu0 0.0
    %582 = vmatprep.subr.mxu0 0.0
    %583 = vmatpush1.msra.mxu0 0.0
    %584 = vmatprep.subr.mxu0 0.0
    %585 = vmatpush1.msra.mxu0 0.0
    %586 = vmatprep.subr.mxu0 0.0
    %587 = vmatpush1.msra.mxu0 0.0
    %588 = vmatprep.subr.mxu0 0.0
    %589 = vmatpush1.msra.mxu0 0.0
    %590 = vmatprep.subr.mxu0 0.0
    %591 = vmatpush1.msra.mxu0 0.0
    %592 = vmatprep.subr.mxu0 0.0
    %593 = vmatpush1.msra.mxu0 0.0
    %594 = vmatprep.subr.mxu0 0.0
    %595 = vmatpush1.msra.mxu0 0.0
    %596 = vmatprep.subr.mxu0 0.0
    %597 = vmatpush1.msra.mxu0 0.0
    %598 = vmatprep.subr.mxu0 0.0
    %599 = vmatpush1.msra.mxu0 0.0
    %600 = vmatprep.subr.mxu0 0.0
    %601 = vmatpush1.msra.mxu0 0.0
    %602 = vmatprep.subr.mxu0 0.0
    %603 = vmatpush1.msra.mxu0 0.0
    %604 = vmatprep.subr.mxu0 0.0
    %605 = vmatpush1.msra.mxu0 0.0
    %606 = vmatprep.subr.mxu0 0.0
    %607 = vmatpush1.msra.mxu0 0.0
    %608 = vmatprep.subr.mxu0 0.0
    %609 = vmatpush1.msra.mxu0 0.0
    %610 = vmatprep.subr.mxu0 0.0
    %611 = vmatpush1.msra.mxu0 0.0
    %612 = vmatprep.subr.mxu0 0.0
    %613 = vmatpush1.msra.mxu0 0.0
    %614 = vmatprep.mubr.f32.mxu0 0.0
    %615 = vmatmul.mubr.f32.gmra.mrb[0].mxu0 %v541
    %v616 = vpop.f32.mrb[0].mxu0
    %v617 = vadd.f32 0.0, %v616
    %v618 = vpop.f32.mrb[0].mxu0
    %619 = vmatprep.mubr.f32.mxu0 0.0
    %620 = vmatmul.mubr.f32.gmra.mrb[0].mxu0 %v544
    %v621 = vpop.f32.mrb[0].mxu0
    %v622 = vadd.f32 0.0, %v621
    %v623 = vpop.f32.mrb[0].mxu0
    %624 = vdwg.mxu0
    %v625 = vmul.f32 %v617, %v323
    %v626 = vmul.f32 %v622, %v326
    %v627 = vsel %vm150, %v625, 0.0
    %v628 = vrot.slane %v627, 4
    %v629 = vadd.f32 %v627, %v628
    %v630 = vrot.slane %v629, 2
    %v631 = vadd.f32 %v629, %v630
    %v632 = vrot.slane %v631, 1
    %v633 = vadd.f32 %v631, %v632
    %v634 = vsel %vm150, %v626, 0.0
    %v635 = vrot.slane %v634, 4
    %v636 = vadd.f32 %v634, %v635
    %v637 = vrot.slane %v636, 2
    %v638 = vadd.f32 %v636, %v637
    %v639 = vrot.slane %v638, 1
    %v640 = vadd.f32 %v638, %v639
    %v641 = vld [vmem:[#allocation13] sm:$0xff]
    %v642 = vld [vmem:[#allocation2] sm:$0x1]
    %v643 = vunpack.c.l.bf16 %v642
    %v644 = vpack.c.bf16 %v633, %v633
    %v645 = vpack.c.bf16 %v640, %v640
    %v646 = vld [vmem:[#allocation10] sm:$0xf]
    %v647 = vld [vmem:[#allocation10 + $0x4] sm:$0xf]
    %v648 = vld [vmem:[#allocation10 + $0x8] sm:$0xf]
    %v649 = vld [vmem:[#allocation10 + $0xc] sm:$0xf]
    %v652 = vunpack.c.l.b16 %v644
    %v653 = vunpack.c.l.b16 %v645
    %vm654 = vcmask 1041409
    %v655 = vsel %vm654, %v653, %v652
    %v656 = vpack.c.b16 %v655, %v655
    %v661 = vunpack.c.l.b16 %v646
    %v662 = vunpack.c.l.b16 %v647
    %v663 = vunpack.c.l.b16 %v648
    %v664 = vunpack.c.l.b16 %v649
    %v665 = vpack.c.b16 %v662, %v661
    %v666 = vpack.c.b16 %v664, %v663
    %v670 = vsel %vm150, %v656, 0
    %672 = vmatprep.subr.bf16.mxu0 0
    %673 = vmatpush1.bf16.msra.mxu0 %v665
    %674 = vmatprep.subr.bf16.mxu0 0
    %675 = vmatpush1.bf16.msra.mxu0 %v666
    %676 = vmatprep.subr.bf16.mxu0 0
    %677 = vmatpush1.bf16.msra.mxu0 0
    %678 = vmatprep.subr.bf16.mxu0 0
    %679 = vmatpush1.bf16.msra.mxu0 0
    %680 = vmatprep.subr.bf16.mxu0 0
    %681 = vmatpush1.bf16.msra.mxu0 0
    %682 = vmatprep.subr.bf16.mxu0 0
    %683 = vmatpush1.bf16.msra.mxu0 0
    %684 = vmatprep.subr.bf16.mxu0 0
    %685 = vmatpush1.bf16.msra.mxu0 0
    %686 = vmatprep.subr.bf16.mxu0 0
    %687 = vmatpush1.bf16.msra.mxu0 0
    %688 = vmatprep.subr.bf16.mxu0 0
    %689 = vmatpush1.bf16.msra.mxu0 0
    %690 = vmatprep.subr.bf16.mxu0 0
    %691 = vmatpush1.bf16.msra.mxu0 0
    %692 = vmatprep.subr.bf16.mxu0 0
    %693 = vmatpush1.bf16.msra.mxu0 0
    %694 = vmatprep.subr.bf16.mxu0 0
    %695 = vmatpush1.bf16.msra.mxu0 0
    %696 = vmatprep.subr.bf16.mxu0 0
    %697 = vmatpush1.bf16.msra.mxu0 0
    %698 = vmatprep.subr.bf16.mxu0 0
    %699 = vmatpush1.bf16.msra.mxu0 0
    %700 = vmatprep.subr.bf16.mxu0 0
    %701 = vmatpush1.bf16.msra.mxu0 0
    %702 = vmatprep.subr.bf16.mxu0 0
    %703 = vmatpush1.bf16.msra.mxu0 0
    %704 = vmatprep.mubr.bf16.mxu0 0
    %705 = vmatmul.mubr.bf16.gmra.mrb[0].mxu0 %v670
    %v706 = vpop.f32.mrb[0].mxu0
    %v707 = vadd.f32 %v643, %v706
    %v708 = vpop.f32.mrb[0].mxu0
    %v709 = vpop.f32.mrb[0].mxu0
    %v710 = vpop.f32.mrb[0].mxu0
    %711 = vdwg.mxu0
    %vm712 = vcmask 254976
    %v713 = vsel %vm712, %v707, 0.0
    %714 = vadd.xlane.f32.xlu0 %v713
    %v715 = vpop.xlane.xlu0 %714
    %v716 = vrcp.pop 32.0
    %v717 = vmul.f32 %v715, %v716
    %v718 = vsub.f32 %v707, %v717
    %v719 = vmul.f32 %v718, %v718
    %v720 = vsel %vm712, %v719, 0.0
    %721 = vadd.xlane.f32.xlu0 %v720
    %v722 = vpop.xlane.xlu0 %721
    %v723 = vmul.f32 %v722, %v716
    %v724 = vadd.f32 %v723, 1e-06
    %v725 = vrsqrt.pop %v724
    %v726 = vmul.f32 %v718, %v725
    %v727 = vlaneseq
    %v728 = vshrl.u32 %v727, 7
    %v729 = vsub.s32 2, %v728
    %v730 = vrot.slane %v641, %v729
    %v731 = vmul.f32 %v726, %v730
    %v732 = vlaneseq
    %v733 = vshrl.u32 %v732, 7
    %v734 = vsub.s32 3, %v733
    %v735 = vrot.slane %v641, %v734
    %v736 = vadd.f32 %v731, %v735
    %v737 = vpack.c.bf16 %v736, %v736
    %v738 = vld [vmem:[#allocation11] sm:$0xf]
    %v739 = vld [vmem:[#allocation11 + $0x4] sm:$0xf]
    %v740 = vld [vmem:[#allocation11 + $0x8] sm:$0xf]
    %v741 = vld [vmem:[#allocation11 + $0xc] sm:$0xf]
    %v742 = vlaneseq
    %v743 = vshrl.u32 %v742, 7
    %v744 = vsub.s32 0, %v743
    %v745 = vrot.slane %v641, %v744
    %v750 = vunpack.c.l.b16 %v738
    %v751 = vunpack.c.l.b16 %v739
    %v752 = vunpack.c.l.b16 %v740
    %v753 = vunpack.c.l.b16 %v741
    %v754 = vpack.c.b16 %v751, %v750
    %v755 = vpack.c.b16 %v753, %v752
    %v759 = vsel %vm150, %v737, 0
    %761 = vmatprep.subr.bf16.mxu0 0
    %762 = vmatpush1.bf16.msra.mxu0 %v754
    %763 = vmatprep.subr.bf16.mxu0 0
    %764 = vmatpush1.bf16.msra.mxu0 %v755
    %765 = vmatprep.subr.bf16.mxu0 0
    %766 = vmatpush1.bf16.msra.mxu0 0
    %767 = vmatprep.subr.bf16.mxu0 0
    %768 = vmatpush1.bf16.msra.mxu0 0
    %769 = vmatprep.subr.bf16.mxu0 0
    %770 = vmatpush1.bf16.msra.mxu0 0
    %771 = vmatprep.subr.bf16.mxu0 0
    %772 = vmatpush1.bf16.msra.mxu0 0
    %773 = vmatprep.subr.bf16.mxu0 0
    %774 = vmatpush1.bf16.msra.mxu0 0
    %775 = vmatprep.subr.bf16.mxu0 0
    %776 = vmatpush1.bf16.msra.mxu0 0
    %777 = vmatprep.subr.bf16.mxu0 0
    %778 = vmatpush1.bf16.msra.mxu0 0
    %779 = vmatprep.subr.bf16.mxu0 0
    %780 = vmatpush1.bf16.msra.mxu0 0
    %781 = vmatprep.subr.bf16.mxu0 0
    %782 = vmatpush1.bf16.msra.mxu0 0
    %783 = vmatprep.subr.bf16.mxu0 0
    %784 = vmatpush1.bf16.msra.mxu0 0
    %785 = vmatprep.subr.bf16.mxu0 0
    %786 = vmatpush1.bf16.msra.mxu0 0
    %787 = vmatprep.subr.bf16.mxu0 0
    %788 = vmatpush1.bf16.msra.mxu0 0
    %789 = vmatprep.subr.bf16.mxu0 0
    %790 = vmatpush1.bf16.msra.mxu0 0
    %791 = vmatprep.subr.bf16.mxu0 0
    %792 = vmatpush1.bf16.msra.mxu0 0
    %793 = vmatprep.mubr.bf16.mxu0 0
    %794 = vmatmul.mubr.bf16.gmra.mrb[0].mxu0 %v759
    %v795 = vpop.f32.mrb[0].mxu0
    %v796 = vadd.f32 %v745, %v795
    %v797 = vpop.f32.mrb[0].mxu0
    %v798 = vpop.f32.mrb[0].mxu0
    %v799 = vpop.f32.mrb[0].mxu0
    %800 = vdwg.mxu0
    %v801 = vmax.f32 %v796, 0.0
    %v802 = vpack.c.bf16 %v801, %v801
    %v803 = vld [vmem:[%s9] sm:$0xf]
    %v804 = vld [vmem:[%s9 + $0x4] sm:$0xf]
    %v805 = vld [vmem:[%s9 + $0x8] sm:$0xf]
    %v806 = vld [vmem:[%s9 + $0xc] sm:$0xf]
    %v807 = vlaneseq
    %v808 = vshrl.u32 %v807, 7
    %v809 = vsub.s32 1, %v808
    %v810 = vrot.slane %v641, %v809
    %v815 = vunpack.c.l.b16 %v803
    %v816 = vunpack.c.l.b16 %v804
    %v817 = vunpack.c.l.b16 %v805
    %v818 = vunpack.c.l.b16 %v806
    %v819 = vpack.c.b16 %v816, %v815
    %v820 = vpack.c.b16 %v818, %v817
    %v824 = vsel %vm150, %v802, 0
    %826 = vmatprep.subr.bf16.mxu0 0
    %827 = vmatpush1.bf16.msra.mxu0 %v819
    %828 = vmatprep.subr.bf16.mxu0 0
    %829 = vmatpush1.bf16.msra.mxu0 %v820
    %830 = vmatprep.subr.bf16.mxu0 0
    %831 = vmatpush1.bf16.msra.mxu0 0
    %832 = vmatprep.subr.bf16.mxu0 0
    %833 = vmatpush1.bf16.msra.mxu0 0
    %834 = vmatprep.subr.bf16.mxu0 0
    %835 = vmatpush1.bf16.msra.mxu0 0
    %836 = vmatprep.subr.bf16.mxu0 0
    %837 = vmatpush1.bf16.msra.mxu0 0
    %838 = vmatprep.subr.bf16.mxu0 0
    %839 = vmatpush1.bf16.msra.mxu0 0
    %840 = vmatprep.subr.bf16.mxu0 0
    %841 = vmatpush1.bf16.msra.mxu0 0
    %842 = vmatprep.subr.bf16.mxu0 0
    %843 = vmatpush1.bf16.msra.mxu0 0
    %844 = vmatprep.subr.bf16.mxu0 0
    %845 = vmatpush1.bf16.msra.mxu0 0
    %846 = vmatprep.subr.bf16.mxu0 0
    %847 = vmatpush1.bf16.msra.mxu0 0
    %848 = vmatprep.subr.bf16.mxu0 0
    %849 = vmatpush1.bf16.msra.mxu0 0
    %850 = vmatprep.subr.bf16.mxu0 0
    %851 = vmatpush1.bf16.msra.mxu0 0
    %852 = vmatprep.subr.bf16.mxu0 0
    %853 = vmatpush1.bf16.msra.mxu0 0
    %854 = vmatprep.subr.bf16.mxu0 0
    %855 = vmatpush1.bf16.msra.mxu0 0
    %856 = vmatprep.subr.bf16.mxu0 0
    %857 = vmatpush1.bf16.msra.mxu0 0
    %858 = vmatprep.mubr.bf16.mxu0 0
    %859 = vmatmul.mubr.bf16.gmra.mrb[0].mxu0 %v824
    %v860 = vpop.f32.mrb[0].mxu0
    %v861 = vadd.f32 %v810, %v860
    %v862 = vpop.f32.mrb[0].mxu0
    %v863 = vpop.f32.mrb[0].mxu0
    %v864 = vpop.f32.mrb[0].mxu0
    %865 = vdwg.mxu0
    %v866 = vadd.f32 %v861, %v736
    %v867 = vsel %vm712, %v866, 0.0
    %868 = vadd.xlane.f32.xlu0 %v867
    %v869 = vpop.xlane.xlu0 %868
    %v870 = vmul.f32 %v869, %v716
    %v871 = vsub.f32 %v866, %v870
    %v872 = vmul.f32 %v871, %v871
    %v873 = vsel %vm712, %v872, 0.0
    %874 = vadd.xlane.f32.xlu0 %v873
    %v875 = vpop.xlane.xlu0 %874
    %v876 = vmul.f32 %v875, %v716
    %v877 = vadd.f32 %v876, 1e-06
    %v878 = vrsqrt.pop %v877
    %v879 = vmul.f32 %v871, %v878
    %v880 = vlaneseq
    %v881 = vshrl.u32 %v880, 7
    %v882 = vsub.s32 4, %v881
    %v883 = vrot.slane %v641, %v882
    %v884 = vmul.f32 %v879, %v883
    %v885 = vlaneseq
    %v886 = vshrl.u32 %v885, 7
    %v887 = vsub.s32 5, %v886
    %v888 = vrot.slane %v641, %v887
    %v889 = vadd.f32 %v884, %v888
    %890 = vst.msk [vmem:[#allocation14] sm:$0x3] %vm712, %v889
    // Predicated region
    $region74: #{tpu_custom_call.1} parent=1 // pred_check
      _
    $region75: #{tpu_custom_call.1} parent=1 // pred_check_branch
      %892 = sbr.rel (0) target = $region77
    $region76: #{tpu_custom_call.1} parent=1 // pred_region
      %s894 = ssub.s32 32, 32
      %895 = vsyncadd [#allocation4], %s894
      %s897 = sshll.u32 [#allocation14], 4
      %s898 = int_to_ptr.vmem [resolvable:$true] %s897
      %900 = dma.vmem_to_hbm [thread:$0]  %s898, 32, %s11, [#allocation4]
    $region77: #{tpu_custom_call.1} parent=1 // pred_fallthru
      _
    // Predicated region
    $region78: #{tpu_custom_call.1} parent=1 // pred_check
      _
    $region79: #{tpu_custom_call.1} parent=1 // pred_check_branch
      %902 = sbr.rel (0) target = $region81
    $region80: #{tpu_custom_call.1} parent=1 // pred_region
      _
    $region81: #{tpu_custom_call.1} parent=1 // pred_fallthru
      _
    // Predicated region
    $region82: #{tpu_custom_call.1} parent=1 // pred_check
      _
    $region83: #{tpu_custom_call.1} parent=1 // pred_check_branch
      %904 = sbr.rel (0) target = $region85
    $region84: #{tpu_custom_call.1} parent=1 // pred_region
      %905 = dma.done [#allocation4], 32
    $region85: #{tpu_custom_call.1} parent=1 // pred_fallthru
      _
    // Predicated region
    $region86: #{tpu_custom_call.1} parent=1 // pred_check
      _
    $region87: #{tpu_custom_call.1} parent=1 // pred_check_branch
      %907 = sbr.rel (0) target = $region89
    $region88: #{tpu_custom_call.1} parent=1 // pred_region
      _
    $region89: #{tpu_custom_call.1} parent=1 // pred_fallthru
      _
    %908 = vsyncpa [#allocation3], 1
    %909 = vsyncpa [#allocation6], 1
    %910 = vsyncpa [#allocation9], 1
    %911 = vsyncpa [#allocation12], 1
    %912 = vsyncpa [#allocation4], 1

// kernel: tpu_custom_call.1
$region0: #{tpu_custom_call.1}
  #allocation0 [shape = 'u32[]', space=smem, size = 0x4, offset = 0x4, fixed_abs, tag = 'smem constant byte address 0x4 - core index']
  #allocation1 [shape = 'u32[144,128]{1,0:T(1,128)}', space=vmem, size = 0x12000, scoped, tag = 'internal scratch']
  %s0 = inlined_call_operand.hbm [shape: bf16[2,32], index: 0, kind: input, shape index: {}]
  %s1 = inlined_call_operand.hbm [shape: bf16[16,32], index: 1, kind: input, shape index: {}]
  %s2 = inlined_call_operand.hbm [shape: bf16[16,32], index: 2, kind: input, shape index: {}]
  %s3 = inlined_call_operand.vmem [shape: f32[16,1], index: 3, kind: input, shape index: {}]
  %s4 = inlined_call_operand.vmem [shape: bf16[32,32], index: 4, kind: input, shape index: {}]
  %s5 = inlined_call_operand.vmem [shape: bf16[32,32], index: 5, kind: input, shape index: {}]
  %s6 = inlined_call_operand.hbm [shape: bf16[32,32], index: 6, kind: input, shape index: {}]
  %s7 = inlined_call_operand.hbm [shape: bf16[32,32], index: 7, kind: input, shape index: {}]
  %s8 = inlined_call_operand.hbm [shape: bf16[32,32], index: 8, kind: input, shape index: {}]
  %s9 = inlined_call_operand.vmem [shape: bf16[32,32], index: 9, kind: input, shape index: {}]
  %s10 = inlined_call_operand.hbm [shape: f32[8,32], index: 10, kind: input, shape index: {}]
  %s11 = inlined_call_operand.hbm [shape: f32[2,32], index: 11, kind: output, shape index: {0}]
  %s12 = inlined_call_operand.vmem [shape: f32[16,4], index: 12, kind: output, shape index: {1}]
  %13 = xla_tuple %s11, %s12
  %s14 = sld [smem:[#allocation0]]
  $region90: #{tpu_custom_call.1} parent=0
    _
  %s16 = ssub.s32 1, %s14
  %s17 = scalar_select 0, %s16, %s14
  $region1: #{tpu_custom_call.1} parent=0
    #allocation2 [shape = 'u8[512]{0}', space=vmem, size = 0x400, scoped, tag = 'input window, operand 0, single buffered']
    #allocation3 [shape = 's32[1]{0}', space=sflag, size = 0x4, scoped, tag = 'scoped memory for tpu_custom_call.1']
    #allocation4 [shape = 's32[1]{0}', space=sflag, size = 0x4, scoped, tag = 'scoped memory for tpu_custom_call.1']
    #allocation5 [shape = 'u8[4096]{0}', space=vmem, size = 0x1000, scoped, tag = 'input window, operand 1, single buffered']
    #allocation6 [shape = 's32[1]{0}', space=sflag, size = 0x4, scoped, tag = 'scoped memory for tpu_custom_call.1']
    #allocation7 [shape = 'u8[4096]{0}', space=vmem, size = 0x1000, scoped, tag = 'input window, operand 2, single buffered']
    #allocation8 [shape = 'u8[8192]{0}', space=vmem, size = 0x2000, scoped, tag = 'input window, operand 6, single buffered']
    #allocation9 [shape = 's32[1]{0}', space=sflag, size = 0x4, scoped, tag = 'scoped memory for tpu_custom_call.1']
    #allocation10 [shape = 'u8[8192]{0}', space=vmem, size = 0x2000, scoped, tag = 'input window, operand 7, single buffered']
    #allocation11 [shape = 'u8[8192]{0}', space=vmem, size = 0x2000, scoped, tag = 'input window, operand 8, single buffered']
    #allocation12 [shape = 's32[1]{0}', space=sflag, size = 0x4, scoped, tag = 'scoped memory for tpu_custom_call.1']
    #allocation13 [shape = 'u8[4096]{0}', space=vmem, size = 0x1000, scoped, tag = 'input window, operand 10, single buffered']
    #allocation14 [shape = 'u8[1024]{0}', space=vmem, size = 0x400, scoped, tag = 'output window, operand 0, single buffered']
    %18 = vsyncpa [#allocation3], 0
    %19 = vsyncpa [#allocation6], 0
    %20 = vsyncpa [#allocation9], 0
    %21 = vsyncpa [#allocation12], 0
    %22 = vsyncpa [#allocation4], 0
    // Predicated region
    $region2: #{tpu_custom_call.1} parent=1 // pred_check
      _
    $region3: #{tpu_custom_call.1} parent=1 // pred_check_branch
      %24 = sbr.rel (0) target = $region5
    $region4: #{tpu_custom_call.1} parent=1 // pred_region
      %s26 = ssub.s32 16, 16
      %27 = vsyncadd [#allocation3], %s26
      %s29 = sshll.u32 [#allocation2], 4
      %s30 = int_to_ptr.vmem [resolvable:$true] %s29
      %32 = dma.hbm_to_vmem [thread:$0]  %s0, 16, %s30, [#allocation3]
    $region5: #{tpu_custom_call.1} parent=1 // pred_fallthru
      _
    // Predicated region
    $region6: #{tpu_custom_call.1} parent=1 // pred_check
      _
    $region7: #{tpu_custom_call.1} parent=1 // pred_check_branch
      %34 = sbr.rel (0) target = $region9
    $region8: #{tpu_custom_call.1} parent=1 // pred_region
      %s36 = ssub.s32 128, 128
      %37 = vsyncadd [#allocation6], %s36
      %s38 = sshll.u32 [#allocation5], 4
      %s39 = int_to_ptr.vmem [resolvable:$true] %s38
      %44 = dma.hbm_to_vmem [thread:$0]  %s1, 128, %s39, [#allocation6], 64, 64, 4
    $region9: #{tpu_custom_call.1} parent=1 // pred_fallthru
      _
    // Predicated region
    $region10: #{tpu_custom_call.1} parent=1 // pred_check
      _
    $region11: #{tpu_custom_call.1} parent=1 // pred_check_branch
      %46 = sbr.rel (0) target = $region13
    $region12: #{tpu_custom_call.1} parent=1 // pred_region
      %s48 = ssub.s32 128, 128
      %49 = vsyncadd [#allocation6], %s48
      %s50 = sshll.u32 [#allocation7], 4
      %s51 = int_to_ptr.vmem [resolvable:$true] %s50
      %56 = dma.hbm_to_vmem [thread:$0]  %s2, 128, %s51, [#allocation6], 64, 64, 4
    $region13: #{tpu_custom_call.1} parent=1 // pred_fallthru
      _
    // Predicated region
    $region14: #{tpu_custom_call.1} parent=1 // pred_check
      _
    $region15: #{tpu_custom_call.1} parent=1 // pred_check_branch
      %58 = sbr.rel (0) target = $region17
    $region16: #{tpu_custom_call.1} parent=1 // pred_region
      _
    $region17: #{tpu_custom_call.1} parent=1 // pred_fallthru
      _
    // Predicated region
    $region18: #{tpu_custom_call.1} parent=1 // pred_check
      _
    $region19: #{tpu_custom_call.1} parent=1 // pred_check_branch
      %60 = sbr.rel (0) target = $region21
    $region20: #{tpu_custom_call.1} parent=1 // pred_region
      _
    $region21: #{tpu_custom_call.1} parent=1 // pred_fallthru
      _
    // Predicated region
    $region22: #{tpu_custom_call.1} parent=1 // pred_check
      _
    $region23: #{tpu_custom_call.1} parent=1 // pred_check_branch
      %62 = sbr.rel (0) target = $region25
    $region24: #{tpu_custom_call.1} parent=1 // pred_region
      _
    $region25: #{tpu_custom_call.1} parent=1 // pred_fallthru
      _
    // Predicated region
    $region26: #{tpu_custom_call.1} parent=1 // pred_check
      _
    $region27: #{tpu_custom_call.1} parent=1 // pred_check_branch
      %64 = sbr.rel (0) target = $region29
    $region28: #{tpu_custom_call.1} parent=1 // pred_region
      %s66 = ssub.s32 256, 256
      %67 = vsyncadd [#allocation9], %s66
      %s68 = sshll.u32 [#allocation8], 4
      %s69 = int_to_ptr.vmem [resolvable:$true] %s68
      %74 = dma.hbm_to_vmem [thread:$0]  %s6, 256, %s69, [#allocation9], 64, 64, 4
    $region29: #{tpu_custom_call.1} parent=1 // pred_fallthru
      _
    // Predicated region
    $region30: #{tpu_custom_call.1} parent=1 // pred_check
      _
    $region31: #{tpu_custom_call.1} parent=1 // pred_check_branch
      %76 = sbr.rel (0) target = $region33
    $region32: #{tpu_custom_call.1} parent=1 // pred_region
      %s78 = ssub.s32 256, 256
      %79 = vsyncadd [#allocation9], %s78
      %s80 = sshll.u32 [#allocation10], 4
      %s81 = int_to_ptr.vmem [resolvable:$true] %s80
      %86 = dma.hbm_to_vmem [thread:$0]  %s7, 256, %s81, [#allocation9], 64, 64, 4
    $region33: #{tpu_custom_call.1} parent=1 // pred_fallthru
      _
    // Predicated region
    $region34: #{tpu_custom_call.1} parent=1 // pred_check
      _
    $region35: #{tpu_custom_call.1} parent=1 // pred_check_branch
      %88 = sbr.rel (0) target = $region37
    $region36: #{tpu_custom_call.1} parent=1 // pred_region
      %s90 = ssub.s32 256, 256
      %91 = vsyncadd [#allocation12], %s90
      %s92 = sshll.u32 [#allocation11], 4
      %s93 = int_to_ptr.vmem [resolvable:$true] %s92
      %98 = dma.hbm_to_vmem [thread:$0]  %s8, 256, %s93, [#allocation12], 64, 64, 4
    $region37: #{tpu_custom_call.1} parent=1 // pred_fallthru
      _
    // Predicated region
    $region38: #{tpu_custom_call.1} parent=1 // pred_check
      _
    $region39: #{tpu_custom_call.1} parent=1 // pred_check_branch
      %100 = sbr.rel (0) target = $region41
    $region40: #{tpu_custom_call.1} parent=1 // pred_region
      _
    $region41: #{tpu_custom_call.1} parent=1 // pred_fallthru
      _
    // Predicated region
    $region42: #{tpu_custom_call.1} parent=1 // pred_check
      _
    $region43: #{tpu_custom_call.1} parent=1 // pred_check_branch
      %102 = sbr.rel (0) target = $region45
    $region44: #{tpu_custom_call.1} parent=1 // pred_region
      %s104 = ssub.s32 128, 128
      %105 = vsyncadd [#allocation12], %s104
      %s107 = sshll.u32 [#allocation13], 4
      %s108 = int_to_ptr.vmem [resolvable:$true] %s107
      %110 = dma.hbm_to_vmem [thread:$0]  %s10, 128, %s108, [#allocation12]
    $region45: #{tpu_custom_call.1} parent=1 // pred_fallthru
      _
    // Predicated region
    $region46: #{tpu_custom_call.1} parent=1 // pred_check
      _
    $region47: #{tpu_custom_call.1} parent=1 // pred_check_branch
      %112 = sbr.rel (0) target = $region49
    $region48: #{tpu_custom_call.1} parent=1 // pred_region
      %113 = dma.done [#allocation3], 16
    $region49: #{tpu_custom_call.1} parent=1 // pred_fallthru
      _
    // Predicated region
    $region50: #{tpu_custom_call.1} parent=1 // pred_check
      _
    $region51: #{tpu_custom_call.1} parent=1 // pred_check_branch
      %115 = sbr.rel (0) target = $region53
    $region52: #{tpu_custom_call.1} parent=1 // pred_region
      %116 = dma.done [#allocation6], 128
    $region53: #{tpu_custom_call.1} parent=1 // pred_fallthru
      _
    // Predicated region
    $region54: #{tpu_custom_call.1} parent=1 // pred_check
      _
    $region55: #{tpu_custom_call.1} parent=1 // pred_check_branch
      %118 = sbr.rel (0) target = $region57
    $region56: #{tpu_custom_call.1} parent=1 // pred_region
      %119 = dma.done [#allocation6], 128
    $region57: #{tpu_custom_call.1} parent=1 // pred_fallthru
      _
    // Predicated region
    $region58: #{tpu_custom_call.1} parent=1 // pred_check
      _
    $region59: #{tpu_custom_call.1} parent=1 // pred_check_branch
      %121 = sbr.rel (0) target = $region61
    $region60: #{tpu_custom_call.1} parent=1 // pred_region
      %122 = dma.done [#allocation9], 256
    $region61: #{tpu_custom_call.1} parent=1 // pred_fallthru
      _
    // Predicated region
    $region62: #{tpu_custom_call.1} parent=1 // pred_check
      _
    $region63: #{tpu_custom_call.1} parent=1 // pred_check_branch
      %124 = sbr.rel (0) target = $region65
    $region64: #{tpu_custom_call.1} parent=1 // pred_region
      %125 = dma.done [#allocation9], 256
    $region65: #{tpu_custom_call.1} parent=1 // pred_fallthru
      _
    // Predicated region
    $region66: #{tpu_custom_call.1} parent=1 // pred_check
      _
    $region67: #{tpu_custom_call.1} parent=1 // pred_check_branch
      %127 = sbr.rel (0) target = $region69
    $region68: #{tpu_custom_call.1} parent=1 // pred_region
      %128 = dma.done [#allocation12], 256
    $region69: #{tpu_custom_call.1} parent=1 // pred_fallthru
      _
    // Predicated region
    $region70: #{tpu_custom_call.1} parent=1 // pred_check
      _
    $region71: #{tpu_custom_call.1} parent=1 // pred_check_branch
      %130 = sbr.rel (0) target = $region73
    $region72: #{tpu_custom_call.1} parent=1 // pred_region
      %131 = dma.done [#allocation12], 128
    $region73: #{tpu_custom_call.1} parent=1 // pred_fallthru
      _
    %v133 = vld [vmem:[#allocation2] sm:$0x1]
    %v134 = vld [vmem:[%s4] sm:$0xf]
    %v135 = vld [vmem:[%s4 + $0x4] sm:$0xf]
    %v136 = vld [vmem:[%s4 + $0x8] sm:$0xf]
    %v137 = vld [vmem:[%s4 + $0xc] sm:$0xf]
    %v142 = vunpack.c.l.b16 %v134
    %v143 = vunpack.c.l.b16 %v135
    %v144 = vunpack.c.l.b16 %v136
    %v145 = vunpack.c.l.b16 %v137
    %v146 = vpack.c.b16 %v143, %v142
    %v147 = vpack.c.b16 %v145, %v144
    %vm150 = vcmask 261120
    %v152 = vsel %vm150, %v133, 0
    %154 = vmatprep.subr.bf16.mxu0 0
    %155 = vmatpush1.bf16.msra.mxu0 %v146
    %156 = vmatprep.subr.bf16.mxu0 0
    %157 = vmatpush1.bf16.msra.mxu0 %v147
    %158 = vmatprep.subr.bf16.mxu0 0
    %159 = vmatpush1.bf16.msra.mxu0 0
    %160 = vmatprep.subr.bf16.mxu0 0
    %161 = vmatpush1.bf16.msra.mxu0 0
    %162 = vmatprep.subr.bf16.mxu0 0
    %163 = vmatpush1.bf16.msra.mxu0 0
    %164 = vmatprep.subr.bf16.mxu0 0
    %165 = vmatpush1.bf16.msra.mxu0 0
    %166 = vmatprep.subr.bf16.mxu0 0
    %167 = vmatpush1.bf16.msra.mxu0 0
    %168 = vmatprep.subr.bf16.mxu0 0
    %169 = vmatpush1.bf16.msra.mxu0 0
    %170 = vmatprep.subr.bf16.mxu0 0
    %171 = vmatpush1.bf16.msra.mxu0 0
    %172 = vmatprep.subr.bf16.mxu0 0
    %173 = vmatpush1.bf16.msra.mxu0 0
    %174 = vmatprep.subr.bf16.mxu0 0
    %175 = vmatpush1.bf16.msra.mxu0 0
    %176 = vmatprep.subr.bf16.mxu0 0
    %177 = vmatpush1.bf16.msra.mxu0 0
    %178 = vmatprep.subr.bf16.mxu0 0
    %179 = vmatpush1.bf16.msra.mxu0 0
    %180 = vmatprep.subr.bf16.mxu0 0
    %181 = vmatpush1.bf16.msra.mxu0 0
    %182 = vmatprep.subr.bf16.mxu0 0
    %183 = vmatpush1.bf16.msra.mxu0 0
    %184 = vmatprep.subr.bf16.mxu0 0
    %185 = vmatpush1.bf16.msra.mxu0 0
    %186 = vmatprep.mubr.bf16.mxu0 0
    %187 = vmatmul.mubr.bf16.gmra.mrb[0].mxu0 %v152
    %v188 = vpop.f32.mrb[0].mxu0
    %v189 = vadd.f32 0.0, %v188
    %v190 = vpop.f32.mrb[0].mxu0
    %v191 = vpop.f32.mrb[0].mxu0
    %v192 = vpop.f32.mrb[0].mxu0
    %193 = vdwg.mxu0
    %v194 = vmul.f32 %v189, 0.35355338
    %v195 = vld [vmem:[#allocation5] sm:$0xf]
    %v196 = vld [vmem:[#allocation5 + $0x4] sm:$0xf]
    %v197 = vld [vmem:[%s5] sm:$0xf]
    %v198 = vld [vmem:[%s5 + $0x4] sm:$0xf]
    %v199 = vld [vmem:[%s5 + $0x8] sm:$0xf]
    %v200 = vld [vmem:[%s5 + $0xc] sm:$0xf]
    %v203 = vunpack.c.l.b16 %v195
    %v204 = vunpack.c.l.b16 %v196
    %v205 = vpack.c.b16 %v204, %v203
    %v210 = vunpack.c.l.b16 %v197
    %v211 = vunpack.c.l.b16 %v198
    %v212 = vunpack.c.l.b16 %v199
    %v213 = vunpack.c.l.b16 %v200
    %v214 = vpack.c.b16 %v211, %v210
    %v215 = vpack.c.b16 %v213, %v212
    %v219 = vsel %vm150, %v205, 0
    %221 = vmatprep.subr.bf16.mxu0 0
    %222 = vmatpush1.bf16.msra.mxu0 %v214
    %223 = vmatprep.subr.bf16.mxu0 0
    %224 = vmatpush1.bf16.msra.mxu0 %v215
    %225 = vmatprep.subr.bf16.mxu0 0
    %226 = vmatpush1.bf16.msra.mxu0 0
    %227 = vmatprep.subr.bf16.mxu0 0
    %228 = vmatpush1.bf16.msra.mxu0 0
    %229 = vmatprep.subr.bf16.mxu0 0
    %230 = vmatpush1.bf16.msra.mxu0 0
    %231 = vmatprep.subr.bf16.mxu0 0
    %232 = vmatpush1.bf16.msra.mxu0 0
    %233 = vmatprep.subr.bf16.mxu0 0
    %234 = vmatpush1.bf16.msra.mxu0 0
    %235 = vmatprep.subr.bf16.mxu0 0
    %236 = vmatpush1.bf16.msra.mxu0 0
    %237 = vmatprep.subr.bf16.mxu0 0
    %238 = vmatpush1.bf16.msra.mxu0 0
    %239 = vmatprep.subr.bf16.mxu0 0
    %240 = vmatpush1.bf16.msra.mxu0 0
    %241 = vmatprep.subr.bf16.mxu0 0
    %242 = vmatpush1.bf16.msra.mxu0 0
    %243 = vmatprep.subr.bf16.mxu0 0
    %244 = vmatpush1.bf16.msra.mxu0 0
    %245 = vmatprep.subr.bf16.mxu0 0
    %246 = vmatpush1.bf16.msra.mxu0 0
    %247 = vmatprep.subr.bf16.mxu0 0
    %248 = vmatpush1.bf16.msra.mxu0 0
    %249 = vmatprep.subr.bf16.mxu0 0
    %250 = vmatpush1.bf16.msra.mxu0 0
    %251 = vmatprep.subr.bf16.mxu0 0
    %252 = vmatpush1.bf16.msra.mxu0 0
    %253 = vmatprep.mubr.bf16.mxu0 0
    %254 = vmatmul.mubr.bf16.gmra.mrb[0].mxu0 %v219
    %v255 = vpop.f32.mrb[0].mxu0
    %v256 = vadd.f32 0.0, %v255
    %v257 = vpop.f32.mrb[0].mxu0
    %v258 = vpop.f32.mrb[0].mxu0
    %v259 = vadd.f32 0.0, %v258
    %v260 = vpop.f32.mrb[0].mxu0
    %261 = vdwg.mxu0
    %v262 = vld [vmem:[#allocation7] sm:$0xf]
    %v263 = vld [vmem:[#allocation7 + $0x4] sm:$0xf]
    %v264 = vld [vmem:[#allocation8] sm:$0xf]
    %v265 = vld [vmem:[#allocation8 + $0x4] sm:$0xf]
    %v266 = vld [vmem:[#allocation8 + $0x8] sm:$0xf]
    %v267 = vld [vmem:[#allocation8 + $0xc] sm:$0xf]
    %v270 = vunpack.c.l.b16 %v262
    %v271 = vunpack.c.l.b16 %v263
    %v272 = vpack.c.b16 %v271, %v270
    %v277 = vunpack.c.l.b16 %v264
    %v278 = vunpack.c.l.b16 %v265
    %v279 = vunpack.c.l.b16 %v266
    %v280 = vunpack.c.l.b16 %v267
    %v281 = vpack.c.b16 %v278, %v277
    %v282 = vpack.c.b16 %v280, %v279
    %v286 = vsel %vm150, %v272, 0
    %288 = vmatprep.subr.bf16.mxu0 0
    %289 = vmatpush1.bf16.msra.mxu0 %v281
    %290 = vmatprep.subr.bf16.mxu0 0
    %291 = vmatpush1.bf16.msra.mxu0 %v282
    %292 = vmatprep.subr.bf16.mxu0 0
    %293 = vmatpush1.bf16.msra.mxu0 0
    %294 = vmatprep.subr.bf16.mxu0 0
    %295 = vmatpush1.bf16.msra.mxu0 0
    %296 = vmatprep.subr.bf16.mxu0 0
    %297 = vmatpush1.bf16.msra.mxu0 0
    %298 = vmatprep.subr.bf16.mxu0 0
    %299 = vmatpush1.bf16.msra.mxu0 0
    %300 = vmatprep.subr.bf16.mxu0 0
    %301 = vmatpush1.bf16.msra.mxu0 0
    %302 = vmatprep.subr.bf16.mxu0 0
    %303 = vmatpush1.bf16.msra.mxu0 0
    %304 = vmatprep.subr.bf16.mxu0 0
    %305 = vmatpush1.bf16.msra.mxu0 0
    %306 = vmatprep.subr.bf16.mxu0 0
    %307 = vmatpush1.bf16.msra.mxu0 0
    %308 = vmatprep.subr.bf16.mxu0 0
    %309 = vmatpush1.bf16.msra.mxu0 0
    %310 = vmatprep.subr.bf16.mxu0 0
    %311 = vmatpush1.bf16.msra.mxu0 0
    %312 = vmatprep.subr.bf16.mxu0 0
    %313 = vmatpush1.bf16.msra.mxu0 0
    %314 = vmatprep.subr.bf16.mxu0 0
    %315 = vmatpush1.bf16.msra.mxu0 0
    %316 = vmatprep.subr.bf16.mxu0 0
    %317 = vmatpush1.bf16.msra.mxu0 0
    %318 = vmatprep.subr.bf16.mxu0 0
    %319 = vmatpush1.bf16.msra.mxu0 0
    %320 = vmatprep.mubr.bf16.mxu0 0
    %321 = vmatmul.mubr.bf16.gmra.mrb[0].mxu0 %v286
    %v322 = vpop.f32.mrb[0].mxu0
    %v323 = vadd.f32 0.0, %v322
    %v324 = vpop.f32.mrb[0].mxu0
    %v325 = vpop.f32.mrb[0].mxu0
    %v326 = vadd.f32 0.0, %v325
    %v327 = vpop.f32.mrb[0].mxu0
    %328 = vdwg.mxu0
    %v329 = vlaneseq
    %v330 = vshrl.u32 %v329, 7
    %v331 = vadd.s32 %v330, 8
    %v332 = vadd.s32 %v330, 16
    %v333 = vadd.s32 %v330, 24
    %v334 = vlaneseq
    %v335 = vand.u32 %v334, 127
    %v336 = vmul.u32 %v335, 8
    %vm337 = vcmp.ge.s32.totalorder %v330, %v336
    %vm338 = vcmp.ge.s32.totalorder %v331, %v336
    %vm339 = vcmp.ge.s32.totalorder %v332, %v336
    %vm340 = vcmp.ge.s32.totalorder %v333, %v336
    %v341 = vadd.s32 %v335, 1
    %v342 = vmul.u32 %v341, 8
    %vm343 = vcmp.lt.s32.totalorder %v330, %v342
    %vm344 = vcmp.lt.s32.totalorder %v331, %v342
    %vm345 = vcmp.lt.s32.totalorder %v332, %v342
    %vm346 = vcmp.lt.s32.totalorder %v333, %v342
    %vm347 = vmand %vm337, %vm343
    %vm348 = vmand %vm338, %vm344
    %vm349 = vmand %vm339, %vm345
    %vm350 = vmand %vm340, %vm346
    %v351 = vsel %vm347, 1, 0
    %v352 = vsel %vm348, 1, 0
    %v353 = vsel %vm349, 1, 0
    %v354 = vsel %vm350, 1, 0
    %v355 = vcvt.s32.f32 %v351
    %v356 = vcvt.s32.f32 %v352
    %v357 = vcvt.s32.f32 %v353
    %v358 = vcvt.s32.f32 %v354
    %v359 = vmul.u32 %v330, 8
    %vm360 = vcmp.ge.s32.totalorder %v335, %v359
    %v361 = vadd.s32 %v330, 1
    %v362 = vmul.u32 %v361, 8
    %vm363 = vcmp.lt.s32.totalorder %v335, %v362
    %vm364 = vmand %vm360, %vm363
    %v365 = vsel %vm364, 1, 0
    %v366 = vcvt.s32.f32 %v365
    %v369 = vunpack.c.l.s4 1966171168
    %v370 = vunpack.c.0.s8 %v369
    %v371 = vlaneseq
    %v372 = vshrl.u32 %v371, 7
    %v373 = vsub.s32 %v370, %v372
    %v374 = vrot.slane %v194, %v373
    %v375 = vcombine.high %v374, %v374
    %v377 = vunpack.c.l.s4 1966171168
    %v378 = vunpack.c.0.s8 %v377
    %v379 = vlaneseq
    %v380 = vshrl.u32 %v379, 7
    %v381 = vsub.s32 %v378, %v380
    %v382 = vrot.slane %v374, %v381
    %v384 = vunpack.c.l.s4 1966171168
    %v385 = vunpack.c.0.s8 %v384
    %v386 = vlaneseq
    %v387 = vshrl.u32 %v386, 7
    %v388 = vsub.s32 %v385, %v387
    %v389 = vrot.slane %v375, %v388
    %v390 = vlaneseq
    %v391 = vshrl.u32 %v390, 7
    %v392 = vsub.s32 0, %v391
    %v393 = vrot.slane %v382, %v392
    %v394 = vlaneseq
    %v395 = vshrl.u32 %v394, 7
    %v396 = vsub.s32 0, %v395
    %v397 = vrot.slane %v389, %v396
    %v400 = vmul.f32 %v393, %v256
    %v401 = vmul.f32 %v397, %v259
    %v403 = vsel %vm150, %v400, 0
    %v406 = vsel %vm150, %v401, 0
    %408 = vmatprep.subr.mxu0 0.0
    %409 = vmatpush1.msra.mxu0 %v355
    %410 = vmatprep.subr.mxu0 0.0
    %411 = vmatpush1.msra.mxu0 %v356
    %412 = vmatprep.subr.mxu0 0.0
    %413 = vmatpush1.msra.mxu0 %v357
    %414 = vmatprep.subr.mxu0 0.0
    %415 = vmatpush1.msra.mxu0 %v358
    %416 = vmatprep.subr.mxu0 0.0
    %417 = vmatpush1.msra.mxu0 0.0
    %418 = vmatprep.subr.mxu0 0.0
    %419 = vmatpush1.msra.mxu0 0.0
    %420 = vmatprep.subr.mxu0 0.0
    %421 = vmatpush1.msra.mxu0 0.0
    %422 = vmatprep.subr.mxu0 0.0
    %423 = vmatpush1.msra.mxu0 0.0
    %424 = vmatprep.subr.mxu0 0.0
    %425 = vmatpush1.msra.mxu0 0.0
    %426 = vmatprep.subr.mxu0 0.0
    %427 = vmatpush1.msra.mxu0 0.0
    %428 = vmatprep.subr.mxu0 0.0
    %429 = vmatpush1.msra.mxu0 0.0
    %430 = vmatprep.subr.mxu0 0.0
    %431 = vmatpush1.msra.mxu0 0.0
    %432 = vmatprep.subr.mxu0 0.0
    %433 = vmatpush1.msra.mxu0 0.0
    %434 = vmatprep.subr.mxu0 0.0
    %435 = vmatpush1.msra.mxu0 0.0
    %436 = vmatprep.subr.mxu0 0.0
    %437 = vmatpush1.msra.mxu0 0.0
    %438 = vmatprep.subr.mxu0 0.0
    %439 = vmatpush1.msra.mxu0 0.0
    %440 = vmatprep.subr.mxu0 0.0
    %441 = vmatpush1.msra.mxu0 0.0
    %442 = vmatprep.subr.mxu0 0.0
    %443 = vmatpush1.msra.mxu0 0.0
    %444 = vmatprep.subr.mxu0 0.0
    %445 = vmatpush1.msra.mxu0 0.0
    %446 = vmatprep.subr.mxu0 0.0
    %447 = vmatpush1.msra.mxu0 0.0
    %448 = vmatprep.subr.mxu0 0.0
    %449 = vmatpush1.msra.mxu0 0.0
    %450 = vmatprep.subr.mxu0 0.0
    %451 = vmatpush1.msra.mxu0 0.0
    %452 = vmatprep.subr.mxu0 0.0
    %453 = vmatpush1.msra.mxu0 0.0
    %454 = vmatprep.subr.mxu0 0.0
    %455 = vmatpush1.msra.mxu0 0.0
    %456 = vmatprep.subr.mxu0 0.0
    %457 = vmatpush1.msra.mxu0 0.0
    %458 = vmatprep.subr.mxu0 0.0
    %459 = vmatpush1.msra.mxu0 0.0
    %460 = vmatprep.subr.mxu0 0.0
    %461 = vmatpush1.msra.mxu0 0.0
    %462 = vmatprep.subr.mxu0 0.0
    %463 = vmatpush1.msra.mxu0 0.0
    %464 = vmatprep.subr.mxu0 0.0
    %465 = vmatpush1.msra.mxu0 0.0
    %466 = vmatprep.subr.mxu0 0.0
    %467 = vmatpush1.msra.mxu0 0.0
    %468 = vmatprep.subr.mxu0 0.0
    %469 = vmatpush1.msra.mxu0 0.0
    %470 = vmatprep.subr.mxu0 0.0
    %471 = vmatpush1.msra.mxu0 0.0
    %472 = vmatprep.mubr.f32.mxu0 0.0
    %473 = vmatmul.mubr.f32.gmra.mrb[0].mxu0 %v403
    %v474 = vpop.f32.mrb[0].mxu0
    %v475 = vadd.f32 0.0, %v474
    %v476 = vpop.f32.mrb[0].mxu0
    %477 = vmatprep.mubr.f32.mxu0 0.0
    %478 = vmatmul.mubr.f32.gmra.mrb[0].mxu0 %v406
    %v479 = vpop.f32.mrb[0].mxu0
    %v480 = vadd.f32 0.0, %v479
    %v481 = vpop.f32.mrb[0].mxu0
    %482 = vdwg.mxu0
    %v483 = vld [vmem:[%s3] sm:$0xff]
    %v484 = vld [vmem:[%s3 + $0x8] sm:$0xff]
    %vm485 = vcmp.gt.f32.partialorder %v483, 0.0
    %vm486 = vcmp.gt.f32.partialorder %v484, 0.0
    %v487 = vsel %vm485, 1, 0
    %v488 = vsel %vm486, 1, 0
    %489 = vset.pattern.permute.xlu0 0
    %490 = vperm.xlu0 %489, %v487
    %v491 = vpop.permute.xlu0 %490
    %492 = vset.pattern.permute.xlu0 0
    %493 = vperm.xlu0 %492, %v488
    %v494 = vpop.permute.xlu0 %493
    %vm495 = vcmp.eq.s32.totalorder %v491, 1
    %vm496 = vcmp.eq.s32.totalorder %v494, 1
    %v497 = vsel %vm495, %v475, -1e+09
    %v498 = vsel %vm496, %v480, -1e+09
    %vm499 = vcmask 31744
    %v500 = vsel %vm499, %v497, -inf
    %v501 = vrot.slane %v500, 4
    %v502 = vmax.f32 %v500, %v501
    %v503 = vrot.slane %v502, 2
    %v504 = vmax.f32 %v502, %v503
    %v505 = vrot.slane %v504, 1
    %v506 = vmax.f32 %v504, %v505
    %v507 = vsel %vm499, %v498, -inf
    %v508 = vrot.slane %v507, 4
    %v509 = vmax.f32 %v507, %v508
    %v510 = vrot.slane %v509, 2
    %v511 = vmax.f32 %v509, %v510
    %v512 = vrot.slane %v511, 1
    %v513 = vmax.f32 %v511, %v512
    %v514 = vsub.f32 %v497, %v506
    %v515 = vsub.f32 %v498, %v513
    %v516 = vmul.f32 %v514, 1.442695
    %v517 = vpow.pop %v516
    %v518 = vmul.f32 %v515, 1.442695
    %v519 = vpow.pop %v518
    %v520 = vsel %vm499, %v517, 0.0
    %v521 = vrot.slane %v520, 4
    %v522 = vadd.f32 %v520, %v521
    %v523 = vrot.slane %v522, 2
    %v524 = vadd.f32 %v522, %v523
    %v525 = vrot.slane %v524, 1
    %v526 = vadd.f32 %v524, %v525
    %v527 = vsel %vm499, %v519, 0.0
    %v528 = vrot.slane %v527, 4
    %v529 = vadd.f32 %v527, %v528
    %v530 = vrot.slane %v529, 2
    %v531 = vadd.f32 %v529, %v530
    %v532 = vrot.slane %v531, 1
    %v533 = vadd.f32 %v531, %v532
    %v534 = vrcp.pop %v526
    %v535 = vmul.f32 %v517, %v534
    %v536 = vrcp.pop %v533
    %v537 = vmul.f32 %v519, %v536
    %538 = vst.msk [vmem:[%s12] sm:$0xff] %vm499, %v535
    %539 = vst.msk [vmem:[%s12 + $0x8] sm:$0xff] %vm499, %v537
    %v541 = vsel %vm499, %v535, 0
    %v544 = vsel %vm499, %v537, 0
    %vm546 = vcmask 1043456
    %v548 = vsel %vm546, %v366, 0
    %550 = vmatprep.subr.mxu0 0.0
    %551 = vmatpush1.msra.mxu0 %v548
    %552 = vmatprep.subr.mxu0 0.0
    %553 = vmatpush1.msra.mxu0 0.0
    %554 = vmatprep.subr.mxu0 0.0
    %555 = vmatpush1.msra.mxu0 0.0
    %556 = vmatprep.subr.mxu0 0.0
    %557 = vmatpush1.msra.mxu0 0.0
    %558 = vmatprep.subr.mxu0 0.0
    %559 = vmatpush1.msra.mxu0 0.0
    %560 = vmatprep.subr.mxu0 0.0
    %561 = vmatpush1.msra.mxu0 0.0
    %562 = vmatprep.subr.mxu0 0.0
    %563 = vmatpush1.msra.mxu0 0.0
    %564 = vmatprep.subr.mxu0 0.0
    %565 = vmatpush1.msra.mxu0 0.0
    %566 = vmatprep.subr.mxu0 0.0
    %567 = vmatpush1.msra.mxu0 0.0
    %568 = vmatprep.subr.mxu0 0.0
    %569 = vmatpush1.msra.mxu0 0.0
    %570 = vmatprep.subr.mxu0 0.0
    %571 = vmatpush1.msra.mxu0 0.0
    %572 = vmatprep.subr.mxu0 0.0
    %573 = vmatpush1.msra.mxu0 0.0
    %574 = vmatprep.subr.mxu0 0.0
    %575 = vmatpush1.msra.mxu0 0.0
    %576 = vmatprep.subr.mxu0 0.0
    %577 = vmatpush1.msra.mxu0 0.0
    %578 = vmatprep.subr.mxu0 0.0
    %579 = vmatpush1.msra.mxu0 0.0
    %580 = vmatprep.subr.mxu0 0.0
    %581 = vmatpush1.msra.mxu0 0.0
    %582 = vmatprep.subr.mxu0 0.0
    %583 = vmatpush1.msra.mxu0 0.0
    %584 = vmatprep.subr.mxu0 0.0
    %585 = vmatpush1.msra.mxu0 0.0
    %586 = vmatprep.subr.mxu0 0.0
    %587 = vmatpush1.msra.mxu0 0.0
    %588 = vmatprep.subr.mxu0 0.0
    %589 = vmatpush1.msra.mxu0 0.0
    %590 = vmatprep.subr.mxu0 0.0
    %591 = vmatpush1.msra.mxu0 0.0
    %592 = vmatprep.subr.mxu0 0.0
    %593 = vmatpush1.msra.mxu0 0.0
    %594 = vmatprep.subr.mxu0 0.0
    %595 = vmatpush1.msra.mxu0 0.0
    %596 = vmatprep.subr.mxu0 0.0
    %597 = vmatpush1.msra.mxu0 0.0
    %598 = vmatprep.subr.mxu0 0.0
    %599 = vmatpush1.msra.mxu0 0.0
    %600 = vmatprep.subr.mxu0 0.0
    %601 = vmatpush1.msra.mxu0 0.0
    %602 = vmatprep.subr.mxu0 0.0
    %603 = vmatpush1.msra.mxu0 0.0
    %604 = vmatprep.subr.mxu0 0.0
    %605 = vmatpush1.msra.mxu0 0.0
    %606 = vmatprep.subr.mxu0 0.0
    %607 = vmatpush1.msra.mxu0 0.0
    %608 = vmatprep.subr.mxu0 0.0
    %609 = vmatpush1.msra.mxu0 0.0
    %610 = vmatprep.subr.mxu0 0.0
    %611 = vmatpush1.msra.mxu0 0.0
    %612 = vmatprep.subr.mxu0 0.0
    %613 = vmatpush1.msra.mxu0 0.0
    %614 = vmatprep.mubr.f32.mxu0 0.0
    %615 = vmatmul.mubr.f32.gmra.mrb[0].mxu0 %v541
    %v616 = vpop.f32.mrb[0].mxu0
    %v617 = vadd.f32 0.0, %v616
    %v618 = vpop.f32.mrb[0].mxu0
    %619 = vmatprep.mubr.f32.mxu0 0.0
    %620 = vmatmul.mubr.f32.gmra.mrb[0].mxu0 %v544
    %v621 = vpop.f32.mrb[0].mxu0
    %v622 = vadd.f32 0.0, %v621
    %v623 = vpop.f32.mrb[0].mxu0
    %624 = vdwg.mxu0
    %v625 = vmul.f32 %v617, %v323
    %v626 = vmul.f32 %v622, %v326
    %v627 = vsel %vm150, %v625, 0.0
    %v628 = vrot.slane %v627, 4
    %v629 = vadd.f32 %v627, %v628
    %v630 = vrot.slane %v629, 2
    %v631 = vadd.f32 %v629, %v630
    %v632 = vrot.slane %v631, 1
    %v633 = vadd.f32 %v631, %v632
    %v634 = vsel %vm150, %v626, 0.0
    %v635 = vrot.slane %v634, 4
    %v636 = vadd.f32 %v634, %v635
    %v637 = vrot.slane %v636, 2
    %v638 = vadd.f32 %v636, %v637
    %v639 = vrot.slane %v638, 1
    %v640 = vadd.f32 %v638, %v639
    %v641 = vld [vmem:[#allocation13] sm:$0xff]
    %v642 = vld [vmem:[#allocation2] sm:$0x1]
    %v643 = vunpack.c.l.bf16 %v642
    %v644 = vpack.c.bf16 %v633, %v633
    %v645 = vpack.c.bf16 %v640, %v640
    %v646 = vld [vmem:[#allocation10] sm:$0xf]
    %v647 = vld [vmem:[#allocation10 + $0x4] sm:$0xf]
    %v648 = vld [vmem:[#allocation10 + $0x8] sm:$0xf]
    %v649 = vld [vmem:[#allocation10 + $0xc] sm:$0xf]
    %v652 = vunpack.c.l.b16 %v644
    %v653 = vunpack.c.l.b16 %v645
    %vm654 = vcmask 1041409
    %v655 = vsel %vm654, %v653, %v652
    %v656 = vpack.c.b16 %v655, %v655
    %v661 = vunpack.c.l.b16 %v646
    %v662 = vunpack.c.l.b16 %v647
    %v663 = vunpack.c.l.b16 %v648
    %v664 = vunpack.c.l.b16 %v649
    %v665 = vpack.c.b16 %v662, %v661
    %v666 = vpack.c.b16 %v664, %v663
    %v670 = vsel %vm150, %v656, 0
    %672 = vmatprep.subr.bf16.mxu0 0
    %673 = vmatpush1.bf16.msra.mxu0 %v665
    %674 = vmatprep.subr.bf16.mxu0 0
    %675 = vmatpush1.bf16.msra.mxu0 %v666
    %676 = vmatprep.subr.bf16.mxu0 0
    %677 = vmatpush1.bf16.msra.mxu0 0
    %678 = vmatprep.subr.bf16.mxu0 0
    %679 = vmatpush1.bf16.msra.mxu0 0
    %680 = vmatprep.subr.bf16.mxu0 0
    %681 = vmatpush1.bf16.msra.mxu0 0
    %682 = vmatprep.subr.bf16.mxu0 0
    %683 = vmatpush1.bf16.msra.mxu0 0
    %684 = vmatprep.subr.bf16.mxu0 0
    %685 = vmatpush1.bf16.msra.mxu0 0
    %686 = vmatprep.subr.bf16.mxu0 0
    %687 = vmatpush1.bf16.msra.mxu0 0
    %688 = vmatprep.subr.bf16.mxu0 0
    %689 = vmatpush1.bf16.msra.mxu0 0
    %690 = vmatprep.subr.bf16.mxu0 0
    %691 = vmatpush1.bf16.msra.mxu0 0
    %692 = vmatprep.subr.bf16.mxu0 0
    %693 = vmatpush1.bf16.msra.mxu0 0
    %694 = vmatprep.subr.bf16.mxu0 0
    %695 = vmatpush1.bf16.msra.mxu0 0
    %696 = vmatprep.subr.bf16.mxu0 0
    %697 = vmatpush1.bf16.msra.mxu0 0
    %698 = vmatprep.subr.bf16.mxu0 0
    %699 = vmatpush1.bf16.msra.mxu0 0
    %700 = vmatprep.subr.bf16.mxu0 0
    %701 = vmatpush1.bf16.msra.mxu0 0
    %702 = vmatprep.subr.bf16.mxu0 0
    %703 = vmatpush1.bf16.msra.mxu0 0
    %704 = vmatprep.mubr.bf16.mxu0 0
    %705 = vmatmul.mubr.bf16.gmra.mrb[0].mxu0 %v670
    %v706 = vpop.f32.mrb[0].mxu0
    %v707 = vadd.f32 %v643, %v706
    %v708 = vpop.f32.mrb[0].mxu0
    %v709 = vpop.f32.mrb[0].mxu0
    %v710 = vpop.f32.mrb[0].mxu0
    %711 = vdwg.mxu0
    %vm712 = vcmask 254976
    %v713 = vsel %vm712, %v707, 0.0
    %714 = vadd.xlane.f32.xlu0 %v713
    %v715 = vpop.xlane.xlu0 %714
    %v716 = vrcp.pop 32.0
    %v717 = vmul.f32 %v715, %v716
    %v718 = vsub.f32 %v707, %v717
    %v719 = vmul.f32 %v718, %v718
    %v720 = vsel %vm712, %v719, 0.0
    %721 = vadd.xlane.f32.xlu0 %v720
    %v722 = vpop.xlane.xlu0 %721
    %v723 = vmul.f32 %v722, %v716
    %v724 = vadd.f32 %v723, 1e-06
    %v725 = vrsqrt.pop %v724
    %v726 = vmul.f32 %v718, %v725
    %v727 = vlaneseq
    %v728 = vshrl.u32 %v727, 7
    %v729 = vsub.s32 2, %v728
    %v730 = vrot.slane %v641, %v729
    %v731 = vmul.f32 %v726, %v730
    %v732 = vlaneseq
    %v733 = vshrl.u32 %v732, 7
    %v734 = vsub.s32 3, %v733
    %v735 = vrot.slane %v641, %v734
    %v736 = vadd.f32 %v731, %v735
    %v737 = vpack.c.bf16 %v736, %v736
    %v738 = vld [vmem:[#allocation11] sm:$0xf]
    %v739 = vld [vmem:[#allocation11 + $0x4] sm:$0xf]
    %v740 = vld [vmem:[#allocation11 + $0x8] sm:$0xf]
    %v741 = vld [vmem:[#allocation11 + $0xc] sm:$0xf]
    %v742 = vlaneseq
    %v743 = vshrl.u32 %v742, 7
    %v744 = vsub.s32 0, %v743
    %v745 = vrot.slane %v641, %v744
    %v750 = vunpack.c.l.b16 %v738
    %v751 = vunpack.c.l.b16 %v739
    %v752 = vunpack.c.l.b16 %v740
    %v753 = vunpack.c.l.b16 %v741
    %v754 = vpack.c.b16 %v751, %v750
    %v755 = vpack.c.b16 %v753, %v752
    %v759 = vsel %vm150, %v737, 0
    %761 = vmatprep.subr.bf16.mxu0 0
    %762 = vmatpush1.bf16.msra.mxu0 %v754
    %763 = vmatprep.subr.bf16.mxu0 0
    %764 = vmatpush1.bf16.msra.mxu0 %v755
    %765 = vmatprep.subr.bf16.mxu0 0
    %766 = vmatpush1.bf16.msra.mxu0 0
    %767 = vmatprep.subr.bf16.mxu0 0
    %768 = vmatpush1.bf16.msra.mxu0 0
    %769 = vmatprep.subr.bf16.mxu0 0
    %770 = vmatpush1.bf16.msra.mxu0 0
    %771 = vmatprep.subr.bf16.mxu0 0
    %772 = vmatpush1.bf16.msra.mxu0 0
    %773 = vmatprep.subr.bf16.mxu0 0
    %774 = vmatpush1.bf16.msra.mxu0 0
    %775 = vmatprep.subr.bf16.mxu0 0
    %776 = vmatpush1.bf16.msra.mxu0 0
    %777 = vmatprep.subr.bf16.mxu0 0
    %778 = vmatpush1.bf16.msra.mxu0 0
    %779 = vmatprep.subr.bf16.mxu0 0
    %780 = vmatpush1.bf16.msra.mxu0 0
    %781 = vmatprep.subr.bf16.mxu0 0
    %782 = vmatpush1.bf16.msra.mxu0 0
    %783 = vmatprep.subr.bf16.mxu0 0
    %784 = vmatpush1.bf16.msra.mxu0 0
    %785 = vmatprep.subr.bf16.mxu0 0
    %786 = vmatpush1.bf16.msra.mxu0 0
    %787 = vmatprep.subr.bf16.mxu0 0
    %788 = vmatpush1.bf16.msra.mxu0 0
    %789 = vmatprep.subr.bf16.mxu0 0
    %790 = vmatpush1.bf16.msra.mxu0 0
    %791 = vmatprep.subr.bf16.mxu0 0
    %792 = vmatpush1.bf16.msra.mxu0 0
    %793 = vmatprep.mubr.bf16.mxu0 0
    %794 = vmatmul.mubr.bf16.gmra.mrb[0].mxu0 %v759
    %v795 = vpop.f32.mrb[0].mxu0
    %v796 = vadd.f32 %v745, %v795
    %v797 = vpop.f32.mrb[0].mxu0
    %v798 = vpop.f32.mrb[0].mxu0
    %v799 = vpop.f32.mrb[0].mxu0
    %800 = vdwg.mxu0
    %v801 = vmax.f32 %v796, 0.0
    %v802 = vpack.c.bf16 %v801, %v801
    %v803 = vld [vmem:[%s9] sm:$0xf]
    %v804 = vld [vmem:[%s9 + $0x4] sm:$0xf]
    %v805 = vld [vmem:[%s9 + $0x8] sm:$0xf]
    %v806 = vld [vmem:[%s9 + $0xc] sm:$0xf]
    %v807 = vlaneseq
    %v808 = vshrl.u32 %v807, 7
    %v809 = vsub.s32 1, %v808
    %v810 = vrot.slane %v641, %v809
    %v815 = vunpack.c.l.b16 %v803
    %v816 = vunpack.c.l.b16 %v804
    %v817 = vunpack.c.l.b16 %v805
    %v818 = vunpack.c.l.b16 %v806
    %v819 = vpack.c.b16 %v816, %v815
    %v820 = vpack.c.b16 %v818, %v817
    %v824 = vsel %vm150, %v802, 0
    %826 = vmatprep.subr.bf16.mxu0 0
    %827 = vmatpush1.bf16.msra.mxu0 %v819
    %828 = vmatprep.subr.bf16.mxu0 0
    %829 = vmatpush1.bf16.msra.mxu0 %v820
    %830 = vmatprep.subr.bf16.mxu0 0
    %831 = vmatpush1.bf16.msra.mxu0 0
    %832 = vmatprep.subr.bf16.mxu0 0
    %833 = vmatpush1.bf16.msra.mxu0 0
    %834 = vmatprep.subr.bf16.mxu0 0
    %835 = vmatpush1.bf16.msra.mxu0 0
    %836 = vmatprep.subr.bf16.mxu0 0
    %837 = vmatpush1.bf16.msra.mxu0 0
    %838 = vmatprep.subr.bf16.mxu0 0
    %839 = vmatpush1.bf16.msra.mxu0 0
    %840 = vmatprep.subr.bf16.mxu0 0
    %841 = vmatpush1.bf16.msra.mxu0 0
    %842 = vmatprep.subr.bf16.mxu0 0
    %843 = vmatpush1.bf16.msra.mxu0 0
    %844 = vmatprep.subr.bf16.mxu0 0
    %845 = vmatpush1.bf16.msra.mxu0 0
    %846 = vmatprep.subr.bf16.mxu0 0
    %847 = vmatpush1.bf16.msra.mxu0 0
    %848 = vmatprep.subr.bf16.mxu0 0
    %849 = vmatpush1.bf16.msra.mxu0 0
    %850 = vmatprep.subr.bf16.mxu0 0
    %851 = vmatpush1.bf16.msra.mxu0 0
    %852 = vmatprep.subr.bf16.mxu0 0
    %853 = vmatpush1.bf16.msra.mxu0 0
    %854 = vmatprep.subr.bf16.mxu0 0
    %855 = vmatpush1.bf16.msra.mxu0 0
    %856 = vmatprep.subr.bf16.mxu0 0
    %857 = vmatpush1.bf16.msra.mxu0 0
    %858 = vmatprep.mubr.bf16.mxu0 0
    %859 = vmatmul.mubr.bf16.gmra.mrb[0].mxu0 %v824
    %v860 = vpop.f32.mrb[0].mxu0
    %v861 = vadd.f32 %v810, %v860
    %v862 = vpop.f32.mrb[0].mxu0
    %v863 = vpop.f32.mrb[0].mxu0
    %v864 = vpop.f32.mrb[0].mxu0
    %865 = vdwg.mxu0
    %v866 = vadd.f32 %v861, %v736
    %v867 = vsel %vm712, %v866, 0.0
    %868 = vadd.xlane.f32.xlu0 %v867
    %v869 = vpop.xlane.xlu0 %868
    %v870 = vmul.f32 %v869, %v716
    %v871 = vsub.f32 %v866, %v870
    %v872 = vmul.f32 %v871, %v871
    %v873 = vsel %vm712, %v872, 0.0
    %874 = vadd.xlane.f32.xlu0 %v873
    %v875 = vpop.xlane.xlu0 %874
    %v876 = vmul.f32 %v875, %v716
    %v877 = vadd.f32 %v876, 1e-06
    %v878 = vrsqrt.pop %v877
    %v879 = vmul.f32 %v871, %v878
    %v880 = vlaneseq
    %v881 = vshrl.u32 %v880, 7
    %v882 = vsub.s32 4, %v881
    %v883 = vrot.slane %v641, %v882
    %v884 = vmul.f32 %v879, %v883
    %v885 = vlaneseq
    %v886 = vshrl.u32 %v885, 7
    %v887 = vsub.s32 5, %v886
    %v888 = vrot.slane %v641, %v887
    %v889 = vadd.f32 %v884, %v888
    %890 = vst.msk [vmem:[#allocation14] sm:$0x3] %vm712, %v889
    // Predicated region
    $region74: #{tpu_custom_call.1} parent=1 // pred_check
      _
    $region75: #{tpu_custom_call.1} parent=1 // pred_check_branch
      %892 = sbr.rel (0) target = $region77
    $region76: #{tpu_custom_call.1} parent=1 // pred_region
      %s894 = ssub.s32 32, 32
      %895 = vsyncadd [#allocation4], %s894
      %s897 = sshll.u32 [#allocation14], 4
      %s898 = int_to_ptr.vmem [resolvable:$true] %s897
      %900 = dma.vmem_to_hbm [thread:$0]  %s898, 32, %s11, [#allocation4]
    $region77: #{tpu_custom_call.1} parent=1 // pred_fallthru
      _
    // Predicated region
    $region78: #{tpu_custom_call.1} parent=1 // pred_check
      _
    $region79: #{tpu_custom_call.1} parent=1 // pred_check_branch
      %902 = sbr.rel (0) target = $region81
    $region80: #{tpu_custom_call.1} parent=1 // pred_region
      _
    $region81: #{tpu_custom_call.1} parent=1 // pred_fallthru
      _
    // Predicated region
    $region82: #{tpu_custom_call.1} parent=1 // pred_check
      _
    $region83: #{tpu_custom_call.1} parent=1 // pred_check_branch
      %904 = sbr.rel (0) target = $region85
    $region84: #{tpu_custom_call.1} parent=1 // pred_region
      %905 = dma.done [#allocation4], 32
    $region85: #{tpu_custom_call.1} parent=1 // pred_fallthru
      _
    // Predicated region
    $region86: #{tpu_custom_call.1} parent=1 // pred_check
      _
    $region87: #{tpu_custom_call.1} parent=1 // pred_check_branch
      %907 = sbr.rel (0) target = $region89
    $region88: #{tpu_custom_call.1} parent=1 // pred_region
      _
    $region89: #{tpu_custom_call.1} parent=1 // pred_fallthru
      _
    %908 = vsyncpa [#allocation3], 1
    %909 = vsyncpa [#allocation6], 1
    %910 = vsyncpa [#allocation9], 1
    %911 = vsyncpa [#allocation12], 1
    %912 = vsyncpa [#allocation4], 1

</llo_original>
